<compile_context>
chip_gen: v7x
topology: tpu7x:2x2x1
jax: 0.10.0
libtpu: 0.0.40
codegen_flags: <defaults>
</compile_context>

<pallas_src>
import numpy as np
import jax
import jax.numpy as jnp
from jax.experimental import pallas as pl
from jax.experimental.pallas import tpu as pltpu


def _sigmoid(x):
    # sigmoid(x) == 0.5 * (tanh(x/2) + 1): one EUP tanh, no VPU divide.
    return 0.5 * (jnp.tanh(0.5 * x) + 1.0)


def _make_lstm_kernel(hg, t_chunk, tail_len):
    """hg: lane-aligned per-gate width; tail_len: valid steps in the last chunk."""

    def kernel(pre_ref, wh_ref, h_ref, c_ref):
        ti = pl.program_id(1)  # time-chunk index (sequential / "arbitrary", innermost)

        @pl.when(ti == 0)
        def _init():
            h_ref[...] = jnp.zeros_like(h_ref)
            c_ref[...] = jnp.zeros_like(c_ref)

        def step(t, carry):
            h, c = carry                                   # f32 (B_blk, Hg)
            # x@W_x + b was hoisted outside the kernel; only h@W_h is recurrent.
            # W_h is read from VMEM inside the dot (not pinned in vregs).
            z = pre_ref[t].astype(jnp.float32) + jnp.dot(
                h.astype(wh_ref.dtype), wh_ref[...],
                preferred_element_type=jnp.float32)        # (B_blk, 4*Hg)
            i_g = _sigmoid(z[:, 0 * hg:1 * hg])
            f_g = _sigmoid(z[:, 1 * hg:2 * hg])
            g_g = jnp.tanh(z[:, 2 * hg:3 * hg])
            o_g = _sigmoid(z[:, 3 * hg:4 * hg])
            c_new = f_g * c + i_g * g_g
            h_new = o_g * jnp.tanh(c_new)
            return h_new, c_new

        def run(n_steps):
            # Actually unroll the time loop (review item 1).
            unroll = True if n_steps <= 32 else 8
            h_fin, c_fin = jax.lax.fori_loop(
                0, n_steps, step, (h_ref[...], c_ref[...]), unroll=unroll)
            h_ref[...] = h_fin   # single store per chunk (not per time step)
            c_ref[...] = c_fin

        if tail_len == t_chunk:
            run(t_chunk)
        else:
            last = pl.num_programs(1) - 1

            @pl.when(ti != last)
            def _full_chunk():
                run(t_chunk)

            @pl.when(ti == last)
            def _tail_chunk():   # statically shorter trip count; no masking at all
                run(tail_len)

    return kernel


def lstm_forward(x, params, *, t_chunk=None, b_block=None,
                 pre_dtype=jnp.float32, wh_dtype=jnp.float32):
    """x: (batch, seq, feature) float32. Returns (h_T, c_T), each (batch, hidden).

    pre_dtype: storage dtype for the hoisted pre-activation stream (bf16 halves
        the dominant HBM traffic; cast back to f32 inside the kernel, no bf16 dot).
    wh_dtype: dtype of the resident recurrent weight for the MXU.  Keep f32 here;
        on real v6e/v7x hardware bf16 halves resident VMEM and uses the bf16 MXU
        (the sandbox CPU-interpret dot thunk does not support BF16xBF16=F32).
    """
    B, S, F = x.shape
    H = params["w_ii"].shape[1]

    # ---- per-gate lane alignment (review item 11) ----
    Hg = ((H + 127) // 128) * 128

    def padc(w):   # pad gate columns H -> Hg
        return jnp.pad(w, ((0, 0), (0, Hg - H))) if Hg != H else w

    def padb(b):
        return jnp.pad(b, (0, Hg - H)) if Hg != H else b

    # ---- fuse the four gates (order: i, f, g, o) ----
    w_x = jnp.concatenate([padc(params["w_ii"]), padc(params["w_if"]),
                           padc(params["w_ig"]), padc(params["w_io"])], axis=1)   # (F, 4Hg)
    w_h = jnp.concatenate([padc(params["w_hi"]), padc(params["w_hf"]),
                           padc(params["w_hg"]), padc(params["w_ho"])], axis=1)   # (H, 4Hg)
    if Hg != H:
        w_h = jnp.pad(w_h, ((0, Hg - H), (0, 0)))                                 # (Hg, 4Hg)
    bias = jnp.concatenate([padb(params["b_ii"] + params["b_hi"]),
                            padb(params["b_if"] + params["b_hf"]),
                            padb(params["b_ig"] + params["b_hg"]),
                            padb(params["b_io"] + params["b_ho"])])               # (4Hg,)

    # ---- hoist input projection; transpose x (small) instead of pre (4x larger) ----
    x_sbf = jnp.swapaxes(x, 0, 1)                                                 # (S, B, F)
    pre = jnp.einsum("sbf,fg->sbg", x_sbf, w_x,
                     preferred_element_type=jnp.float32) + bias[None, None, :]    # (S, B, 4Hg) f32
    pre = pre.astype(pre_dtype)   # optional bf16 storage of the dominant HBM stream

    # ---- time chunking (amortize per-grid-step overhead) ----
    if t_chunk is None:
        t_chunk = min(S, 32)
    t_chunk = min(t_chunk, S)
    n_tc = pl.cdiv(S, t_chunk)
    tail_len = S - (n_tc - 1) * t_chunk

    # ---- batch blocking; default uses both v7x TensorCores when possible ----
    if b_block is None:
        b_block = B // 2 if (B % 16 == 0) else B
    assert B % b_block == 0 and (b_block == B or b_block % 8 == 0)
    n_b = B // b_block

    w_h_mm = w_h.astype(wh_dtype)
    kernel = _make_lstm_kernel(Hg, t_chunk, tail_len)

    # ---- explicit VMEM budget (review items 3/9/10) ----
    pre_item = np.dtype(pre_dtype).itemsize
    wh_item = np.dtype(wh_dtype).itemsize
    vmem_need = (2 * t_chunk * b_block * 4 * Hg * pre_item    # pre chunk, double-buffered
                 + 2 * Hg * 4 * Hg * wh_item                  # resident W_h (conservative x2)
                 + 2 * 2 * b_block * Hg * 4)                  # h, c f32 outputs
    # 64 MiB cap is safe on every generation (smallest physical VMEM, v7x per TC).
    vmem_limit = int(min(max(2 * vmem_need, 32 * 1024 * 1024), 64 * 1024 * 1024))

    # TODO(synk): for v7x with large H, set pipeline_mode=pl.Buffered(1) on the
    # constant-index W_h spec, store W_h in bf16, tile the 4*Hg output dim, and
    # optionally drive the MXU via pltpu.matmul_push_rhs/matmul_acc_lhs to hold
    # W_h in staging registers across the time loop.
    grid_spec = pltpu.PrefetchScalarGridSpec(
        num_scalar_prefetch=0,
        # Time axis last => innermost/fastest; h/c output blocks stay resident
        # across it (do not reorder the grid).
        grid=(n_b, n_tc),
        in_specs=[
            # pre-activation time-chunk: (T_CHUNK, B_blk, 4Hg)
            pl.BlockSpec((t_chunk, b_block, 4 * Hg), lambda bi, ti: (ti, bi, 0)),
            # recurrent weight; constant index_map -> stays resident in VMEM
            pl.BlockSpec((Hg, 4 * Hg), lambda bi, ti: (0, 0)),
        ],
        out_specs=[
            pl.BlockSpec((b_block, Hg), lambda bi, ti: (bi, 0)),
            pl.BlockSpec((b_block, Hg), lambda bi, ti: (bi, 0)),
        ],
    )

    h, c = pl.pallas_call(
        kernel,
        out_shape=(jax.ShapeDtypeStruct((B, Hg), jnp.float32),
                   jax.ShapeDtypeStruct((B, Hg), jnp.float32)),
        grid_spec=grid_spec,
        compiler_params=pltpu.CompilerParams(
            dimension_semantics=("parallel", "arbitrary"),
            vmem_limit_bytes=vmem_limit),
    )(pre, w_h_mm)
    return h[:, :H], c[:, :H]


def init_lstm_params(key, input_size, hidden_size):
    """Deterministic xavier-uniform weights (matching nn.init.xavier_uniform_), zero biases."""
    ks = jax.random.split(key, 8)
    lim_i = float(np.sqrt(6.0 / (input_size + hidden_size)))
    lim_h = float(np.sqrt(6.0 / (hidden_size + hidden_size)))

    def u(k, shape, lim):
        return jax.random.uniform(k, shape, jnp.float32, -lim, lim)

    p = {
        "w_ii": u(ks[0], (input_size, hidden_size), lim_i),
        "w_hi": u(ks[1], (hidden_size, hidden_size), lim_h),
        "w_if": u(ks[2], (input_size, hidden_size), lim_i),
        "w_hf": u(ks[3], (hidden_size, hidden_size), lim_h),
        "w_ig": u(ks[4], (input_size, hidden_size), lim_i),
        "w_hg": u(ks[5], (hidden_size, hidden_size), lim_h),
        "w_io": u(ks[6], (input_size, hidden_size), lim_i),
        "w_ho": u(ks[7], (hidden_size, hidden_size), lim_h),
    }
    for name in ("b_ii", "b_hi", "b_if", "b_hf", "b_ig", "b_hg", "b_io", "b_ho"):
        p[name] = jnp.zeros((hidden_size,), jnp.float32)
    return p


def lstm_reference(x, params):
    """Pure-JAX reference mirroring the PyTorch forward exactly."""
    B, S, F = x.shape
    H = params["w_ii"].shape[1]
    h = jnp.zeros((B, H), jnp.float32)
    c = jnp.zeros((B, H), jnp.float32)
    for t in range(S):
        x_t = x[:, t, :]
        i_t = jax.nn.sigmoid(x_t @ params["w_ii"] + params["b_ii"]
                             + h @ params["w_hi"] + params["b_hi"])
        f_t = jax.nn.sigmoid(x_t @ params["w_if"] + params["b_if"]
                             + h @ params["w_hf"] + params["b_hf"])
        g_t = jnp.tanh(x_t @ params["w_ig"] + params["b_ig"]
                       + h @ params["w_hg"] + params["b_hg"])
        o_t = jax.nn.sigmoid(x_t @ params["w_io"] + params["b_io"]
                             + h @ params["w_ho"] + params["b_ho"])
        c = f_t * c + i_t * g_t
        h = o_t * jnp.tanh(c)
    return h, c


if __name__ == "__main__":
    key = jax.random.PRNGKey(0)
    k_x, k_p, k_b, k_x2 = jax.random.split(key, 4)

    batch, seq, input_size, hidden_size = 4, 8, 16, 32
    x = jax.random.normal(k_x, (batch, seq, input_size), jnp.float32)
    params = init_lstm_params(k_p, input_size, hidden_size)

    # 1) default f32 path — exact vs. reference.
    h_out, c_out = lstm_forward(x, params)
    jax.block_until_ready((h_out, c_out))
    h_ref, c_ref = lstm_reference(x, params)
    assert h_out.shape == (batch, hidden_size) and c_out.shape == (batch, hidden_size)
    np.testing.assert_allclose(np.asarray(h_out), np.asarray(h_ref), rtol=1e-5, atol=1e-5)
    np.testing.assert_allclose(np.asarray(c_out), np.asarray(c_ref), rtol=1e-5, atol=1e-5)

    # 2) nonzero biases exercise the fused-bias path.
    bkeys = jax.random.split(k_b, 8)
    for i, name in enumerate(("b_ii", "b_hi", "b_if", "b_hf",
                              "b_ig", "b_hg", "b_io", "b_ho")):
        params[name] = 0.1 * jax.random.normal(bkeys[i], (hidden_size,), jnp.float32)
    h2, c2 = lstm_forward(x, params)
    jax.block_until_ready((h2, c2))
    h_ref2, c_ref2 = lstm_reference(x, params)
    np.testing.assert_allclose(np.asarray(h2), np.asarray(h_ref2), rtol=1e-5, atol=1e-5)
    np.testing.assert_allclose(np.asarray(c2), np.asarray(c_ref2), rtol=1e-5, atol=1e-5)

    # 3) bf16 *storage* of the hoisted pre-activation stream (no bf16 dots).
    h3, c3 = lstm_forward(x, params, pre_dtype=jnp.bfloat16)
    jax.block_until_ready((h3, c3))
    np.testing.assert_allclose(np.asarray(h3), np.asarray(h_ref2), rtol=5e-2, atol=5e-2)
    np.testing.assert_allclose(np.asarray(c3), np.asarray(c_ref2), rtol=5e-2, atol=5e-2)

    # 4) batch blocking (grid parallel axis) + tail chunk (S % t_chunk != 0).
    batch2, seq2 = 16, 11
    x2 = jax.random.normal(k_x2, (batch2, seq2, input_size), jnp.float32)
    h4, c4 = lstm_forward(x2, params, t_chunk=4)     # b_block defaults to 8 -> grid (2, 3)
    jax.block_until_ready((h4, c4))
    h_ref4, c_ref4 = lstm_reference(x2, params)
    np.testing.assert_allclose(np.asarray(h4), np.asarray(h_ref4), rtol=1e-5, atol=1e-5)
    np.testing.assert_allclose(np.asarray(c4), np.asarray(c_ref4), rtol=1e-5, atol=1e-5)

    print("KERNEL_OK")
</pallas_src>

<mosaic_0001>
module attributes {stable_mosaic.version = 11 : i64} {
  func.func @kernel(%arg0: i32, %arg1: i32, %arg2: memref<8x4x512xf32, #tpu.memory_space<vmem>>, %arg3: memref<128x512xf32, #tpu.memory_space<vmem>>, %arg4: memref<4x128xf32, #tpu.memory_space<vmem>>, %arg5: memref<4x128xf32, #tpu.memory_space<vmem>>) attributes {dimension_semantics = [#tpu.dimension_semantics<parallel>, #tpu.dimension_semantics<arbitrary>], iteration_bounds = array<i64: 1, 1>, scalar_prefetch = 0 : i64, scratch_operands = 0 : i64, tpu.core_type = #tpu.core_type<tc>, window_params = [{transform_indices = @transform_0, window_bounds = array<i64: 8, 4, 512>}, {pipeline_mode = #tpu.pipeline_mode<synchronous>, transform_indices = @transform_1, window_bounds = array<i64: 128, 512>}, {transform_indices = @transform_2, window_bounds = array<i64: 4, 128>}, {transform_indices = @transform_3, window_bounds = array<i64: 4, 128>}]} {
    %c0_i32 = arith.constant 0 : i32
    %0 = arith.cmpi eq, %arg1, %c0_i32 : i32
    %1 = arith.extui %0 : i1 to i32
    %c0_i32_0 = arith.constant 0 : i32
    %2 = arith.cmpi ne, %1, %c0_i32_0 : i32
    scf.if %2 {
      %cst_120 = arith.constant 0.000000e+00 : f32
      %303 = vector.broadcast %cst_120 : f32 to vector<4x128xf32>
      %c0_121 = arith.constant 0 : index
      %c0_122 = arith.constant 0 : index
      %304 = vector.load %arg4[%c0_121, %c0_122] : memref<4x128xf32, #tpu.memory_space<vmem>>, vector<4x128xf32>
      tpu.vector_store %arg4[%c0_121, %c0_122], %303 {strides = array<i32>} : memref<4x128xf32, #tpu.memory_space<vmem>>, vector<4x128xf32>,
      %cst_123 = arith.constant 0.000000e+00 : f32
      %305 = vector.broadcast %cst_123 : f32 to vector<4x128xf32>
      %c0_124 = arith.constant 0 : index
      %c0_125 = arith.constant 0 : index
      %306 = vector.load %arg5[%c0_124, %c0_125] : memref<4x128xf32, #tpu.memory_space<vmem>>, vector<4x128xf32>
      tpu.vector_store %arg5[%c0_124, %c0_125], %305 {strides = array<i32>} : memref<4x128xf32, #tpu.memory_space<vmem>>, vector<4x128xf32>,
    } else {
    }
    %c0 = arith.constant 0 : index
    %c0_1 = arith.constant 0 : index
    %3 = vector.load %arg4[%c0, %c0_1] : memref<4x128xf32, #tpu.memory_space<vmem>>, vector<4x128xf32>
    %c0_2 = arith.constant 0 : index
    %c0_3 = arith.constant 0 : index
    %4 = vector.load %arg5[%c0_2, %c0_3] : memref<4x128xf32, #tpu.memory_space<vmem>>, vector<4x128xf32>
    %c0_i32_4 = arith.constant 0 : i32
    %5 = arith.index_cast %c0_i32_4 : i32 to index
    %c0_5 = arith.constant 0 : index
    %c0_6 = arith.constant 0 : index
    %6 = vector.load %arg2[%5, %c0_5, %c0_6] : memref<8x4x512xf32, #tpu.memory_space<vmem>>, vector<1x4x512xf32>
    %7 = vector.shape_cast %6 : vector<1x4x512xf32> to vector<4x512xf32>
    %c0_7 = arith.constant 0 : index
    %c0_8 = arith.constant 0 : index
    %8 = vector.load %arg3[%c0_7, %c0_8] : memref<128x512xf32, #tpu.memory_space<vmem>>, vector<128x512xf32>
    %cst = arith.constant dense<0.000000e+00> : vector<4x512xf32>
    %9 = tpu.matmul %3, %8, %cst {dimension_numbers = #tpu.dot_dimension_numbers<[1], [0], [0], [1], [0, 0, 1, 1], [], []>} : vector<4x128xf32>, vector<128x512xf32>, vector<4x512xf32> -> vector<4x512xf32>
    %10 = arith.addf %7, %9 : vector<4x512xf32>
    %11 = vector.extract_strided_slice %10 {offsets = [0, 0], sizes = [4, 128], strides = [1, 1]} : vector<4x512xf32> to vector<4x128xf32>
    %cst_9 = arith.constant 5.000000e-01 : f32
    %12 = vector.broadcast %cst_9 : f32 to vector<4x128xf32>
    %13 = arith.mulf %12, %11 : vector<4x128xf32>
    %14 = math.tanh %13 : vector<4x128xf32>
    %cst_10 = arith.constant 1.000000e+00 : f32
    %15 = vector.broadcast %cst_10 : f32 to vector<4x128xf32>
    %16 = arith.addf %14, %15 : vector<4x128xf32>
    %cst_11 = arith.constant 5.000000e-01 : f32
    %17 = vector.broadcast %cst_11 : f32 to vector<4x128xf32>
    %18 = arith.mulf %17, %16 : vector<4x128xf32>
    %19 = vector.extract_strided_slice %10 {offsets = [0, 128], sizes = [4, 128], strides = [1, 1]} : vector<4x512xf32> to vector<4x128xf32>
    %cst_12 = arith.constant 5.000000e-01 : f32
    %20 = vector.broadcast %cst_12 : f32 to vector<4x128xf32>
    %21 = arith.mulf %20, %19 : vector<4x128xf32>
    %22 = math.tanh %21 : vector<4x128xf32>
    %cst_13 = arith.constant 1.000000e+00 : f32
    %23 = vector.broadcast %cst_13 : f32 to vector<4x128xf32>
    %24 = arith.addf %22, %23 : vector<4x128xf32>
    %cst_14 = arith.constant 5.000000e-01 : f32
    %25 = vector.broadcast %cst_14 : f32 to vector<4x128xf32>
    %26 = arith.mulf %25, %24 : vector<4x128xf32>
    %27 = vector.extract_strided_slice %10 {offsets = [0, 256], sizes = [4, 128], strides = [1, 1]} : vector<4x512xf32> to vector<4x128xf32>
    %28 = math.tanh %27 : vector<4x128xf32>
    %29 = vector.extract_strided_slice %10 {offsets = [0, 384], sizes = [4, 128], strides = [1, 1]} : vector<4x512xf32> to vector<4x128xf32>
    %cst_15 = arith.constant 5.000000e-01 : f32
    %30 = vector.broadcast %cst_15 : f32 to vector<4x128xf32>
    %31 = arith.mulf %30, %29 : vector<4x128xf32>
    %32 = math.tanh %31 : vector<4x128xf32>
    %cst_16 = arith.constant 1.000000e+00 : f32
    %33 = vector.broadcast %cst_16 : f32 to vector<4x128xf32>
    %34 = arith.addf %32, %33 : vector<4x128xf32>
    %cst_17 = arith.constant 5.000000e-01 : f32
    %35 = vector.broadcast %cst_17 : f32 to vector<4x128xf32>
    %36 = arith.mulf %35, %34 : vector<4x128xf32>
    %37 = arith.mulf %26, %4 : vector<4x128xf32>
    %38 = arith.mulf %18, %28 : vector<4x128xf32>
    %39 = arith.addf %37, %38 : vector<4x128xf32>
    %40 = math.tanh %39 : vector<4x128xf32>
    %41 = arith.mulf %36, %40 : vector<4x128xf32>
    %c1_i32 = arith.constant 1 : i32
    %42 = arith.index_cast %c1_i32 : i32 to index
    %c0_18 = arith.constant 0 : index
    %c0_19 = arith.constant 0 : index
    %43 = vector.load %arg2[%42, %c0_18, %c0_19] : memref<8x4x512xf32, #tpu.memory_space<vmem>>, vector<1x4x512xf32>
    %44 = vector.shape_cast %43 : vector<1x4x512xf32> to vector<4x512xf32>
    %c0_20 = arith.constant 0 : index
    %c0_21 = arith.constant 0 : index
    %45 = vector.load %arg3[%c0_20, %c0_21] : memref<128x512xf32, #tpu.memory_space<vmem>>, vector<128x512xf32>
    %cst_22 = arith.constant dense<0.000000e+00> : vector<4x512xf32>
    %46 = tpu.matmul %41, %45, %cst_22 {dimension_numbers = #tpu.dot_dimension_numbers<[1], [0], [0], [1], [0, 0, 1, 1], [], []>} : vector<4x128xf32>, vector<128x512xf32>, vector<4x512xf32> -> vector<4x512xf32>
    %47 = arith.addf %44, %46 : vector<4x512xf32>
    %48 = vector.extract_strided_slice %47 {offsets = [0, 0], sizes = [4, 128], strides = [1, 1]} : vector<4x512xf32> to vector<4x128xf32>
    %cst_23 = arith.constant 5.000000e-01 : f32
    %49 = vector.broadcast %cst_23 : f32 to vector<4x128xf32>
    %50 = arith.mulf %49, %48 : vector<4x128xf32>
    %51 = math.tanh %50 : vector<4x128xf32>
    %cst_24 = arith.constant 1.000000e+00 : f32
    %52 = vector.broadcast %cst_24 : f32 to vector<4x128xf32>
    %53 = arith.addf %51, %52 : vector<4x128xf32>
    %cst_25 = arith.constant 5.000000e-01 : f32
    %54 = vector.broadcast %cst_25 : f32 to vector<4x128xf32>
    %55 = arith.mulf %54, %53 : vector<4x128xf32>
    %56 = vector.extract_strided_slice %47 {offsets = [0, 128], sizes = [4, 128], strides = [1, 1]} : vector<4x512xf32> to vector<4x128xf32>
    %cst_26 = arith.constant 5.000000e-01 : f32
    %57 = vector.broadcast %cst_26 : f32 to vector<4x128xf32>
    %58 = arith.mulf %57, %56 : vector<4x128xf32>
    %59 = math.tanh %58 : vector<4x128xf32>
    %cst_27 = arith.constant 1.000000e+00 : f32
    %60 = vector.broadcast %cst_27 : f32 to vector<4x128xf32>
    %61 = arith.addf %59, %60 : vector<4x128xf32>
    %cst_28 = arith.constant 5.000000e-01 : f32
    %62 = vector.broadcast %cst_28 : f32 to vector<4x128xf32>
    %63 = arith.mulf %62, %61 : vector<4x128xf32>
    %64 = vector.extract_strided_slice %47 {offsets = [0, 256], sizes = [4, 128], strides = [1, 1]} : vector<4x512xf32> to vector<4x128xf32>
    %65 = math.tanh %64 : vector<4x128xf32>
    %66 = vector.extract_strided_slice %47 {offsets = [0, 384], sizes = [4, 128], strides = [1, 1]} : vector<4x512xf32> to vector<4x128xf32>
    %cst_29 = arith.constant 5.000000e-01 : f32
    %67 = vector.broadcast %cst_29 : f32 to vector<4x128xf32>
    %68 = arith.mulf %67, %66 : vector<4x128xf32>
    %69 = math.tanh %68 : vector<4x128xf32>
    %cst_30 = arith.constant 1.000000e+00 : f32
    %70 = vector.broadcast %cst_30 : f32 to vector<4x128xf32>
    %71 = arith.addf %69, %70 : vector<4x128xf32>
    %cst_31 = arith.constant 5.000000e-01 : f32
    %72 = vector.broadcast %cst_31 : f32 to vector<4x128xf32>
    %73 = arith.mulf %72, %71 : vector<4x128xf32>
    %74 = arith.mulf %63, %39 : vector<4x128xf32>
    %75 = arith.mulf %55, %65 : vector<4x128xf32>
    %76 = arith.addf %74, %75 : vector<4x128xf32>
    %77 = math.tanh %76 : vector<4x128xf32>
    %78 = arith.mulf %73, %77 : vector<4x128xf32>
    %c2_i32 = arith.constant 2 : i32
    %79 = arith.index_cast %c2_i32 : i32 to index
    %c0_32 = arith.constant 0 : index
    %c0_33 = arith.constant 0 : index
    %80 = vector.load %arg2[%79, %c0_32, %c0_33] : memref<8x4x512xf32, #tpu.memory_space<vmem>>, vector<1x4x512xf32>
    %81 = vector.shape_cast %80 : vector<1x4x512xf32> to vector<4x512xf32>
    %c0_34 = arith.constant 0 : index
    %c0_35 = arith.constant 0 : index
    %82 = vector.load %arg3[%c0_34, %c0_35] : memref<128x512xf32, #tpu.memory_space<vmem>>, vector<128x512xf32>
    %cst_36 = arith.constant dense<0.000000e+00> : vector<4x512xf32>
    %83 = tpu.matmul %78, %82, %cst_36 {dimension_numbers = #tpu.dot_dimension_numbers<[1], [0], [0], [1], [0, 0, 1, 1], [], []>} : vector<4x128xf32>, vector<128x512xf32>, vector<4x512xf32> -> vector<4x512xf32>
    %84 = arith.addf %81, %83 : vector<4x512xf32>
    %85 = vector.extract_strided_slice %84 {offsets = [0, 0], sizes = [4, 128], strides = [1, 1]} : vector<4x512xf32> to vector<4x128xf32>
    %cst_37 = arith.constant 5.000000e-01 : f32
    %86 = vector.broadcast %cst_37 : f32 to vector<4x128xf32>
    %87 = arith.mulf %86, %85 : vector<4x128xf32>
    %88 = math.tanh %87 : vector<4x128xf32>
    %cst_38 = arith.constant 1.000000e+00 : f32
    %89 = vector.broadcast %cst_38 : f32 to vector<4x128xf32>
    %90 = arith.addf %88, %89 : vector<4x128xf32>
    %cst_39 = arith.constant 5.000000e-01 : f32
    %91 = vector.broadcast %cst_39 : f32 to vector<4x128xf32>
    %92 = arith.mulf %91, %90 : vector<4x128xf32>
    %93 = vector.extract_strided_slice %84 {offsets = [0, 128], sizes = [4, 128], strides = [1, 1]} : vector<4x512xf32> to vector<4x128xf32>
    %cst_40 = arith.constant 5.000000e-01 : f32
    %94 = vector.broadcast %cst_40 : f32 to vector<4x128xf32>
    %95 = arith.mulf %94, %93 : vector<4x128xf32>
    %96 = math.tanh %95 : vector<4x128xf32>
    %cst_41 = arith.constant 1.000000e+00 : f32
    %97 = vector.broadcast %cst_41 : f32 to vector<4x128xf32>
    %98 = arith.addf %96, %97 : vector<4x128xf32>
    %cst_42 = arith.constant 5.000000e-01 : f32
    %99 = vector.broadcast %cst_42 : f32 to vector<4x128xf32>
    %100 = arith.mulf %99, %98 : vector<4x128xf32>
    %101 = vector.extract_strided_slice %84 {offsets = [0, 256], sizes = [4, 128], strides = [1, 1]} : vector<4x512xf32> to vector<4x128xf32>
    %102 = math.tanh %101 : vector<4x128xf32>
    %103 = vector.extract_strided_slice %84 {offsets = [0, 384], sizes = [4, 128], strides = [1, 1]} : vector<4x512xf32> to vector<4x128xf32>
    %cst_43 = arith.constant 5.000000e-01 : f32
    %104 = vector.broadcast %cst_43 : f32 to vector<4x128xf32>
    %105 = arith.mulf %104, %103 : vector<4x128xf32>
    %106 = math.tanh %105 : vector<4x128xf32>
    %cst_44 = arith.constant 1.000000e+00 : f32
    %107 = vector.broadcast %cst_44 : f32 to vector<4x128xf32>
    %108 = arith.addf %106, %107 : vector<4x128xf32>
    %cst_45 = arith.constant 5.000000e-01 : f32
    %109 = vector.broadcast %cst_45 : f32 to vector<4x128xf32>
    %110 = arith.mulf %109, %108 : vector<4x128xf32>
    %111 = arith.mulf %100, %76 : vector<4x128xf32>
    %112 = arith.mulf %92, %102 : vector<4x128xf32>
    %113 = arith.addf %111, %112 : vector<4x128xf32>
    %114 = math.tanh %113 : vector<4x128xf32>
    %115 = arith.mulf %110, %114 : vector<4x128xf32>
    %c3_i32 = arith.constant 3 : i32
    %116 = arith.index_cast %c3_i32 : i32 to index
    %c0_46 = arith.constant 0 : index
    %c0_47 = arith.constant 0 : index
    %117 = vector.load %arg2[%116, %c0_46, %c0_47] : memref<8x4x512xf32, #tpu.memory_space<vmem>>, vector<1x4x512xf32>
    %118 = vector.shape_cast %117 : vector<1x4x512xf32> to vector<4x512xf32>
    %c0_48 = arith.constant 0 : index
    %c0_49 = arith.constant 0 : index
    %119 = vector.load %arg3[%c0_48, %c0_49] : memref<128x512xf32, #tpu.memory_space<vmem>>, vector<128x512xf32>
    %cst_50 = arith.constant dense<0.000000e+00> : vector<4x512xf32>
    %120 = tpu.matmul %115, %119, %cst_50 {dimension_numbers = #tpu.dot_dimension_numbers<[1], [0], [0], [1], [0, 0, 1, 1], [], []>} : vector<4x128xf32>, vector<128x512xf32>, vector<4x512xf32> -> vector<4x512xf32>
    %121 = arith.addf %118, %120 : vector<4x512xf32>
    %122 = vector.extract_strided_slice %121 {offsets = [0, 0], sizes = [4, 128], strides = [1, 1]} : vector<4x512xf32> to vector<4x128xf32>
    %cst_51 = arith.constant 5.000000e-01 : f32
    %123 = vector.broadcast %cst_51 : f32 to vector<4x128xf32>
    %124 = arith.mulf %123, %122 : vector<4x128xf32>
    %125 = math.tanh %124 : vector<4x128xf32>
    %cst_52 = arith.constant 1.000000e+00 : f32
    %126 = vector.broadcast %cst_52 : f32 to vector<4x128xf32>
    %127 = arith.addf %125, %126 : vector<4x128xf32>
    %cst_53 = arith.constant 5.000000e-01 : f32
    %128 = vector.broadcast %cst_53 : f32 to vector<4x128xf32>
    %129 = arith.mulf %128, %127 : vector<4x128xf32>
    %130 = vector.extract_strided_slice %121 {offsets = [0, 128], sizes = [4, 128], strides = [1, 1]} : vector<4x512xf32> to vector<4x128xf32>
    %cst_54 = arith.constant 5.000000e-01 : f32
    %131 = vector.broadcast %cst_54 : f32 to vector<4x128xf32>
    %132 = arith.mulf %131, %130 : vector<4x128xf32>
    %133 = math.tanh %132 : vector<4x128xf32>
    %cst_55 = arith.constant 1.000000e+00 : f32
    %134 = vector.broadcast %cst_55 : f32 to vector<4x128xf32>
    %135 = arith.addf %133, %134 : vector<4x128xf32>
    %cst_56 = arith.constant 5.000000e-01 : f32
    %136 = vector.broadcast %cst_56 : f32 to vector<4x128xf32>
    %137 = arith.mulf %136, %135 : vector<4x128xf32>
    %138 = vector.extract_strided_slice %121 {offsets = [0, 256], sizes = [4, 128], strides = [1, 1]} : vector<4x512xf32> to vector<4x128xf32>
    %139 = math.tanh %138 : vector<4x128xf32>
    %140 = vector.extract_strided_slice %121 {offsets = [0, 384], sizes = [4, 128], strides = [1, 1]} : vector<4x512xf32> to vector<4x128xf32>
    %cst_57 = arith.constant 5.000000e-01 : f32
    %141 = vector.broadcast %cst_57 : f32 to vector<4x128xf32>
    %142 = arith.mulf %141, %140 : vector<4x128xf32>
    %143 = math.tanh %142 : vector<4x128xf32>
    %cst_58 = arith.constant 1.000000e+00 : f32
    %144 = vector.broadcast %cst_58 : f32 to vector<4x128xf32>
    %145 = arith.addf %143, %144 : vector<4x128xf32>
    %cst_59 = arith.constant 5.000000e-01 : f32
    %146 = vector.broadcast %cst_59 : f32 to vector<4x128xf32>
    %147 = arith.mulf %146, %145 : vector<4x128xf32>
    %148 = arith.mulf %137, %113 : vector<4x128xf32>
    %149 = arith.mulf %129, %139 : vector<4x128xf32>
    %150 = arith.addf %148, %149 : vector<4x128xf32>
    %151 = math.tanh %150 : vector<4x128xf32>
    %152 = arith.mulf %147, %151 : vector<4x128xf32>
    %c4_i32 = arith.constant 4 : i32
    %153 = arith.index_cast %c4_i32 : i32 to index
    %c0_60 = arith.constant 0 : index
    %c0_61 = arith.constant 0 : index
    %154 = vector.load %arg2[%153, %c0_60, %c0_61] : memref<8x4x512xf32, #tpu.memory_space<vmem>>, vector<1x4x512xf32>
    %155 = vector.shape_cast %154 : vector<1x4x512xf32> to vector<4x512xf32>
    %c0_62 = arith.constant 0 : index
    %c0_63 = arith.constant 0 : index
    %156 = vector.load %arg3[%c0_62, %c0_63] : memref<128x512xf32, #tpu.memory_space<vmem>>, vector<128x512xf32>
    %cst_64 = arith.constant dense<0.000000e+00> : vector<4x512xf32>
    %157 = tpu.matmul %152, %156, %cst_64 {dimension_numbers = #tpu.dot_dimension_numbers<[1], [0], [0], [1], [0, 0, 1, 1], [], []>} : vector<4x128xf32>, vector<128x512xf32>, vector<4x512xf32> -> vector<4x512xf32>
    %158 = arith.addf %155, %157 : vector<4x512xf32>
    %159 = vector.extract_strided_slice %158 {offsets = [0, 0], sizes = [4, 128], strides = [1, 1]} : vector<4x512xf32> to vector<4x128xf32>
    %cst_65 = arith.constant 5.000000e-01 : f32
    %160 = vector.broadcast %cst_65 : f32 to vector<4x128xf32>
    %161 = arith.mulf %160, %159 : vector<4x128xf32>
    %162 = math.tanh %161 : vector<4x128xf32>
    %cst_66 = arith.constant 1.000000e+00 : f32
    %163 = vector.broadcast %cst_66 : f32 to vector<4x128xf32>
    %164 = arith.addf %162, %163 : vector<4x128xf32>
    %cst_67 = arith.constant 5.000000e-01 : f32
    %165 = vector.broadcast %cst_67 : f32 to vector<4x128xf32>
    %166 = arith.mulf %165, %164 : vector<4x128xf32>
    %167 = vector.extract_strided_slice %158 {offsets = [0, 128], sizes = [4, 128], strides = [1, 1]} : vector<4x512xf32> to vector<4x128xf32>
    %cst_68 = arith.constant 5.000000e-01 : f32
    %168 = vector.broadcast %cst_68 : f32 to vector<4x128xf32>
    %169 = arith.mulf %168, %167 : vector<4x128xf32>
    %170 = math.tanh %169 : vector<4x128xf32>
    %cst_69 = arith.constant 1.000000e+00 : f32
    %171 = vector.broadcast %cst_69 : f32 to vector<4x128xf32>
    %172 = arith.addf %170, %171 : vector<4x128xf32>
    %cst_70 = arith.constant 5.000000e-01 : f32
    %173 = vector.broadcast %cst_70 : f32 to vector<4x128xf32>
    %174 = arith.mulf %173, %172 : vector<4x128xf32>
    %175 = vector.extract_strided_slice %158 {offsets = [0, 256], sizes = [4, 128], strides = [1, 1]} : vector<4x512xf32> to vector<4x128xf32>
    %176 = math.tanh %175 : vector<4x128xf32>
    %177 = vector.extract_strided_slice %158 {offsets = [0, 384], sizes = [4, 128], strides = [1, 1]} : vector<4x512xf32> to vector<4x128xf32>
    %cst_71 = arith.constant 5.000000e-01 : f32
    %178 = vector.broadcast %cst_71 : f32 to vector<4x128xf32>
    %179 = arith.mulf %178, %177 : vector<4x128xf32>
    %180 = math.tanh %179 : vector<4x128xf32>
    %cst_72 = arith.constant 1.000000e+00 : f32
    %181 = vector.broadcast %cst_72 : f32 to vector<4x128xf32>
    %182 = arith.addf %180, %181 : vector<4x128xf32>
    %cst_73 = arith.constant 5.000000e-01 : f32
    %183 = vector.broadcast %cst_73 : f32 to vector<4x128xf32>
    %184 = arith.mulf %183, %182 : vector<4x128xf32>
    %185 = arith.mulf %174, %150 : vector<4x128xf32>
    %186 = arith.mulf %166, %176 : vector<4x128xf32>
    %187 = arith.addf %185, %186 : vector<4x128xf32>
    %188 = math.tanh %187 : vector<4x128xf32>
    %189 = arith.mulf %184, %188 : vector<4x128xf32>
    %c5_i32 = arith.constant 5 : i32
    %190 = arith.index_cast %c5_i32 : i32 to index
    %c0_74 = arith.constant 0 : index
    %c0_75 = arith.constant 0 : index
    %191 = vector.load %arg2[%190, %c0_74, %c0_75] : memref<8x4x512xf32, #tpu.memory_space<vmem>>, vector<1x4x512xf32>
    %192 = vector.shape_cast %191 : vector<1x4x512xf32> to vector<4x512xf32>
    %c0_76 = arith.constant 0 : index
    %c0_77 = arith.constant 0 : index
    %193 = vector.load %arg3[%c0_76, %c0_77] : memref<128x512xf32, #tpu.memory_space<vmem>>, vector<128x512xf32>
    %cst_78 = arith.constant dense<0.000000e+00> : vector<4x512xf32>
    %194 = tpu.matmul %189, %193, %cst_78 {dimension_numbers = #tpu.dot_dimension_numbers<[1], [0], [0], [1], [0, 0, 1, 1], [], []>} : vector<4x128xf32>, vector<128x512xf32>, vector<4x512xf32> -> vector<4x512xf32>
    %195 = arith.addf %192, %194 : vector<4x512xf32>
    %196 = vector.extract_strided_slice %195 {offsets = [0, 0], sizes = [4, 128], strides = [1, 1]} : vector<4x512xf32> to vector<4x128xf32>
    %cst_79 = arith.constant 5.000000e-01 : f32
    %197 = vector.broadcast %cst_79 : f32 to vector<4x128xf32>
    %198 = arith.mulf %197, %196 : vector<4x128xf32>
    %199 = math.tanh %198 : vector<4x128xf32>
    %cst_80 = arith.constant 1.000000e+00 : f32
    %200 = vector.broadcast %cst_80 : f32 to vector<4x128xf32>
    %201 = arith.addf %199, %200 : vector<4x128xf32>
    %cst_81 = arith.constant 5.000000e-01 : f32
    %202 = vector.broadcast %cst_81 : f32 to vector<4x128xf32>
    %203 = arith.mulf %202, %201 : vector<4x128xf32>
    %204 = vector.extract_strided_slice %195 {offsets = [0, 128], sizes = [4, 128], strides = [1, 1]} : vector<4x512xf32> to vector<4x128xf32>
    %cst_82 = arith.constant 5.000000e-01 : f32
    %205 = vector.broadcast %cst_82 : f32 to vector<4x128xf32>
    %206 = arith.mulf %205, %204 : vector<4x128xf32>
    %207 = math.tanh %206 : vector<4x128xf32>
    %cst_83 = arith.constant 1.000000e+00 : f32
    %208 = vector.broadcast %cst_83 : f32 to vector<4x128xf32>
    %209 = arith.addf %207, %208 : vector<4x128xf32>
    %cst_84 = arith.constant 5.000000e-01 : f32
    %210 = vector.broadcast %cst_84 : f32 to vector<4x128xf32>
    %211 = arith.mulf %210, %209 : vector<4x128xf32>
    %212 = vector.extract_strided_slice %195 {offsets = [0, 256], sizes = [4, 128], strides = [1, 1]} : vector<4x512xf32> to vector<4x128xf32>
    %213 = math.tanh %212 : vector<4x128xf32>
    %214 = vector.extract_strided_slice %195 {offsets = [0, 384], sizes = [4, 128], strides = [1, 1]} : vector<4x512xf32> to vector<4x128xf32>
    %cst_85 = arith.constant 5.000000e-01 : f32
    %215 = vector.broadcast %cst_85 : f32 to vector<4x128xf32>
    %216 = arith.mulf %215, %214 : vector<4x128xf32>
    %217 = math.tanh %216 : vector<4x128xf32>
    %cst_86 = arith.constant 1.000000e+00 : f32
    %218 = vector.broadcast %cst_86 : f32 to vector<4x128xf32>
    %219 = arith.addf %217, %218 : vector<4x128xf32>
    %cst_87 = arith.constant 5.000000e-01 : f32
    %220 = vector.broadcast %cst_87 : f32 to vector<4x128xf32>
    %221 = arith.mulf %220, %219 : vector<4x128xf32>
    %222 = arith.mulf %211, %187 : vector<4x128xf32>
    %223 = arith.mulf %203, %213 : vector<4x128xf32>
    %224 = arith.addf %222, %223 : vector<4x128xf32>
    %225 = math.tanh %224 : vector<4x128xf32>
    %226 = arith.mulf %221, %225 : vector<4x128xf32>
    %c6_i32 = arith.constant 6 : i32
    %227 = arith.index_cast %c6_i32 : i32 to index
    %c0_88 = arith.constant 0 : index
    %c0_89 = arith.constant 0 : index
    %228 = vector.load %arg2[%227, %c0_88, %c0_89] : memref<8x4x512xf32, #tpu.memory_space<vmem>>, vector<1x4x512xf32>
    %229 = vector.shape_cast %228 : vector<1x4x512xf32> to vector<4x512xf32>
    %c0_90 = arith.constant 0 : index
    %c0_91 = arith.constant 0 : index
    %230 = vector.load %arg3[%c0_90, %c0_91] : memref<128x512xf32, #tpu.memory_space<vmem>>, vector<128x512xf32>
    %cst_92 = arith.constant dense<0.000000e+00> : vector<4x512xf32>
    %231 = tpu.matmul %226, %230, %cst_92 {dimension_numbers = #tpu.dot_dimension_numbers<[1], [0], [0], [1], [0, 0, 1, 1], [], []>} : vector<4x128xf32>, vector<128x512xf32>, vector<4x512xf32> -> vector<4x512xf32>
    %232 = arith.addf %229, %231 : vector<4x512xf32>
    %233 = vector.extract_strided_slice %232 {offsets = [0, 0], sizes = [4, 128], strides = [1, 1]} : vector<4x512xf32> to vector<4x128xf32>
    %cst_93 = arith.constant 5.000000e-01 : f32
    %234 = vector.broadcast %cst_93 : f32 to vector<4x128xf32>
    %235 = arith.mulf %234, %233 : vector<4x128xf32>
    %236 = math.tanh %235 : vector<4x128xf32>
    %cst_94 = arith.constant 1.000000e+00 : f32
    %237 = vector.broadcast %cst_94 : f32 to vector<4x128xf32>
    %238 = arith.addf %236, %237 : vector<4x128xf32>
    %cst_95 = arith.constant 5.000000e-01 : f32
    %239 = vector.broadcast %cst_95 : f32 to vector<4x128xf32>
    %240 = arith.mulf %239, %238 : vector<4x128xf32>
    %241 = vector.extract_strided_slice %232 {offsets = [0, 128], sizes = [4, 128], strides = [1, 1]} : vector<4x512xf32> to vector<4x128xf32>
    %cst_96 = arith.constant 5.000000e-01 : f32
    %242 = vector.broadcast %cst_96 : f32 to vector<4x128xf32>
    %243 = arith.mulf %242, %241 : vector<4x128xf32>
    %244 = math.tanh %243 : vector<4x128xf32>
    %cst_97 = arith.constant 1.000000e+00 : f32
    %245 = vector.broadcast %cst_97 : f32 to vector<4x128xf32>
    %246 = arith.addf %244, %245 : vector<4x128xf32>
    %cst_98 = arith.constant 5.000000e-01 : f32
    %247 = vector.broadcast %cst_98 : f32 to vector<4x128xf32>
    %248 = arith.mulf %247, %246 : vector<4x128xf32>
    %249 = vector.extract_strided_slice %232 {offsets = [0, 256], sizes = [4, 128], strides = [1, 1]} : vector<4x512xf32> to vector<4x128xf32>
    %250 = math.tanh %249 : vector<4x128xf32>
    %251 = vector.extract_strided_slice %232 {offsets = [0, 384], sizes = [4, 128], strides = [1, 1]} : vector<4x512xf32> to vector<4x128xf32>
    %cst_99 = arith.constant 5.000000e-01 : f32
    %252 = vector.broadcast %cst_99 : f32 to vector<4x128xf32>
    %253 = arith.mulf %252, %251 : vector<4x128xf32>
    %254 = math.tanh %253 : vector<4x128xf32>
    %cst_100 = arith.constant 1.000000e+00 : f32
    %255 = vector.broadcast %cst_100 : f32 to vector<4x128xf32>
    %256 = arith.addf %254, %255 : vector<4x128xf32>
    %cst_101 = arith.constant 5.000000e-01 : f32
    %257 = vector.broadcast %cst_101 : f32 to vector<4x128xf32>
    %258 = arith.mulf %257, %256 : vector<4x128xf32>
    %259 = arith.mulf %248, %224 : vector<4x128xf32>
    %260 = arith.mulf %240, %250 : vector<4x128xf32>
    %261 = arith.addf %259, %260 : vector<4x128xf32>
    %262 = math.tanh %261 : vector<4x128xf32>
    %263 = arith.mulf %258, %262 : vector<4x128xf32>
    %c7_i32 = arith.constant 7 : i32
    %264 = arith.index_cast %c7_i32 : i32 to index
    %c0_102 = arith.constant 0 : index
    %c0_103 = arith.constant 0 : index
    %265 = vector.load %arg2[%264, %c0_102, %c0_103] : memref<8x4x512xf32, #tpu.memory_space<vmem>>, vector<1x4x512xf32>
    %266 = vector.shape_cast %265 : vector<1x4x512xf32> to vector<4x512xf32>
    %c0_104 = arith.constant 0 : index
    %c0_105 = arith.constant 0 : index
    %267 = vector.load %arg3[%c0_104, %c0_105] : memref<128x512xf32, #tpu.memory_space<vmem>>, vector<128x512xf32>
    %cst_106 = arith.constant dense<0.000000e+00> : vector<4x512xf32>
    %268 = tpu.matmul %263, %267, %cst_106 {dimension_numbers = #tpu.dot_dimension_numbers<[1], [0], [0], [1], [0, 0, 1, 1], [], []>} : vector<4x128xf32>, vector<128x512xf32>, vector<4x512xf32> -> vector<4x512xf32>
    %269 = arith.addf %266, %268 : vector<4x512xf32>
    %270 = vector.extract_strided_slice %269 {offsets = [0, 0], sizes = [4, 128], strides = [1, 1]} : vector<4x512xf32> to vector<4x128xf32>
    %cst_107 = arith.constant 5.000000e-01 : f32
    %271 = vector.broadcast %cst_107 : f32 to vector<4x128xf32>
    %272 = arith.mulf %271, %270 : vector<4x128xf32>
    %273 = math.tanh %272 : vector<4x128xf32>
    %cst_108 = arith.constant 1.000000e+00 : f32
    %274 = vector.broadcast %cst_108 : f32 to vector<4x128xf32>
    %275 = arith.addf %273, %274 : vector<4x128xf32>
    %cst_109 = arith.constant 5.000000e-01 : f32
    %276 = vector.broadcast %cst_109 : f32 to vector<4x128xf32>
    %277 = arith.mulf %276, %275 : vector<4x128xf32>
    %278 = vector.extract_strided_slice %269 {offsets = [0, 128], sizes = [4, 128], strides = [1, 1]} : vector<4x512xf32> to vector<4x128xf32>
    %cst_110 = arith.constant 5.000000e-01 : f32
    %279 = vector.broadcast %cst_110 : f32 to vector<4x128xf32>
    %280 = arith.mulf %279, %278 : vector<4x128xf32>
    %281 = math.tanh %280 : vector<4x128xf32>
    %cst_111 = arith.constant 1.000000e+00 : f32
    %282 = vector.broadcast %cst_111 : f32 to vector<4x128xf32>
    %283 = arith.addf %281, %282 : vector<4x128xf32>
    %cst_112 = arith.constant 5.000000e-01 : f32
    %284 = vector.broadcast %cst_112 : f32 to vector<4x128xf32>
    %285 = arith.mulf %284, %283 : vector<4x128xf32>
    %286 = vector.extract_strided_slice %269 {offsets = [0, 256], sizes = [4, 128], strides = [1, 1]} : vector<4x512xf32> to vector<4x128xf32>
    %287 = math.tanh %286 : vector<4x128xf32>
    %288 = vector.extract_strided_slice %269 {offsets = [0, 384], sizes = [4, 128], strides = [1, 1]} : vector<4x512xf32> to vector<4x128xf32>
    %cst_113 = arith.constant 5.000000e-01 : f32
    %289 = vector.broadcast %cst_113 : f32 to vector<4x128xf32>
    %290 = arith.mulf %289, %288 : vector<4x128xf32>
    %291 = math.tanh %290 : vector<4x128xf32>
    %cst_114 = arith.constant 1.000000e+00 : f32
    %292 = vector.broadcast %cst_114 : f32 to vector<4x128xf32>
    %293 = arith.addf %291, %292 : vector<4x128xf32>
    %cst_115 = arith.constant 5.000000e-01 : f32
    %294 = vector.broadcast %cst_115 : f32 to vector<4x128xf32>
    %295 = arith.mulf %294, %293 : vector<4x128xf32>
    %296 = arith.mulf %285, %261 : vector<4x128xf32>
    %297 = arith.mulf %277, %287 : vector<4x128xf32>
    %298 = arith.addf %296, %297 : vector<4x128xf32>
    %299 = math.tanh %298 : vector<4x128xf32>
    %300 = arith.mulf %295, %299 : vector<4x128xf32>
    %c8_i32 = arith.constant 8 : i32
    %c0_116 = arith.constant 0 : index
    %c0_117 = arith.constant 0 : index
    %301 = vector.load %arg4[%c0_116, %c0_117] : memref<4x128xf32, #tpu.memory_space<vmem>>, vector<4x128xf32>
    tpu.vector_store %arg4[%c0_116, %c0_117], %300 {strides = array<i32>} : memref<4x128xf32, #tpu.memory_space<vmem>>, vector<4x128xf32>,
    %c0_118 = arith.constant 0 : index
    %c0_119 = arith.constant 0 : index
    %302 = vector.load %arg5[%c0_118, %c0_119] : memref<4x128xf32, #tpu.memory_space<vmem>>, vector<4x128xf32>
    tpu.vector_store %arg5[%c0_118, %c0_119], %298 {strides = array<i32>} : memref<4x128xf32, #tpu.memory_space<vmem>>, vector<4x128xf32>,
    return
  }
  func.func @transform_0(%arg0: i32, %arg1: i32) -> (i32, i32, i32) {
    %c0_i32 = arith.constant 0 : i32
    %c0_i32_0 = arith.constant 0 : i32
    return %arg1, %arg0, %c0_i32 : i32, i32, i32
  }
  func.func @transform_1(%arg0: i32, %arg1: i32) -> (i32, i32) {
    %c0_i32 = arith.constant 0 : i32
    %c0_i32_0 = arith.constant 0 : i32
    %c0_i32_1 = arith.constant 0 : i32
    return %c0_i32, %c0_i32_0 : i32, i32
  }
  func.func @transform_2(%arg0: i32, %arg1: i32) -> (i32, i32) {
    %c0_i32 = arith.constant 0 : i32
    %c0_i32_0 = arith.constant 0 : i32
    return %arg0, %c0_i32 : i32, i32
  }
  func.func @transform_3(%arg0: i32, %arg1: i32) -> (i32, i32) {
    %c0_i32 = arith.constant 0 : i32
    %c0_i32_0 = arith.constant 0 : i32
    return %arg0, %c0_i32 : i32, i32
  }
}

</mosaic_0001>

<llo_original>
// kernel: tpu_custom_call.1
$region0: #{tpu_custom_call.1}
  #allocation0 [shape = 'u32[]', space=smem, size = 0x4, offset = 0x4, fixed_abs, tag = 'smem constant byte address 0x4 - core index']
  #allocation1 [shape = 'u32[144,128]{1,0:T(1,128)}', space=vmem, size = 0x12000, scoped, tag = 'internal scratch']
  %s0 = inlined_call_operand.hbm [shape: f32[8,4,512], index: 0, kind: input, shape index: {}]
  %s1 = inlined_call_operand.hbm [shape: f32[128,512], index: 1, kind: input, shape index: {}]
  %s2 = inlined_call_operand.hbm [shape: f32[4,128], index: 2, kind: output, shape index: {0}]
  %s3 = inlined_call_operand.hbm [shape: f32[4,128], index: 3, kind: output, shape index: {1}]
  %4 = xla_tuple %s2, %s3
  %s5 = sld [smem:[#allocation0]]
  $region38: #{tpu_custom_call.1} parent=0
    _
  %s7 = ssub.s32 1, %s5
  %s8 = scalar_select 0, %s7, %s5
  $region1: #{tpu_custom_call.1} parent=0
    #allocation2 [shape = 'u8[65536]{0}', space=vmem, size = 0x10000, scoped, tag = 'input window, operand 0, single buffered']
    #allocation3 [shape = 's32[1]{0}', space=sflag, size = 0x4, scoped, tag = 'scoped memory for tpu_custom_call.1']
    #allocation4 [shape = 's32[1]{0}', space=sflag, size = 0x4, scoped, tag = 'scoped memory for tpu_custom_call.1']
    #allocation5 [shape = 'u8[262144]{0}', space=vmem, size = 0x40000, scoped, tag = 'input window, operand 1, single buffered']
    #allocation6 [shape = 's32[1]{0}', space=sflag, size = 0x4, scoped, tag = 'scoped memory for tpu_custom_call.1']
    #allocation7 [shape = 'u8[2048]{0}', space=vmem, size = 0x800, scoped, tag = 'output window, operand 0, single buffered']
    #allocation8 [shape = 'u8[2048]{0}', space=vmem, size = 0x800, scoped, tag = 'output window, operand 1, single buffered']
    #allocation9 [shape = 's32[1]{0}', space=sflag, size = 0x4, scoped, tag = 'scoped memory for tpu_custom_call.1']
    %9 = vsyncpa [#allocation3], 0
    %10 = vsyncpa [#allocation6], 0
    %11 = vsyncpa [#allocation4], 0
    %12 = vsyncpa [#allocation9], 0
    // Predicated region
    $region2: #{tpu_custom_call.1} parent=1 // pred_check
      _
    $region3: #{tpu_custom_call.1} parent=1 // pred_check_branch
      %14 = sbr.rel (0) target = $region5
    $region4: #{tpu_custom_call.1} parent=1 // pred_region
      %s16 = ssub.s32 2048, 2048
      %17 = vsyncadd [#allocation3], %s16
      %s18 = sshll.u32 [#allocation2], 4
      %s19 = int_to_ptr.vmem [resolvable:$true] %s18
      %24 = dma.hbm_to_vmem [thread:$0]  %s0, 2048, %s19, [#allocation3], 256, 256, 16
    $region5: #{tpu_custom_call.1} parent=1 // pred_fallthru
      _
    // Predicated region
    $region6: #{tpu_custom_call.1} parent=1 // pred_check
      _
    $region7: #{tpu_custom_call.1} parent=1 // pred_check_branch
      %26 = sbr.rel (0) target = $region9
    $region8: #{tpu_custom_call.1} parent=1 // pred_region
      %s28 = ssub.s32 8192, 8192
      %29 = vsyncadd [#allocation6], %s28
      %s30 = sshll.u32 [#allocation5], 4
      %s31 = int_to_ptr.vmem [resolvable:$true] %s30
      %36 = dma.hbm_to_vmem [thread:$0]  %s1, 8192, %s31, [#allocation6], 512, 512, 32
    $region9: #{tpu_custom_call.1} parent=1 // pred_fallthru
      _
    // Predicated region
    $region10: #{tpu_custom_call.1} parent=1 // pred_check
      _
    $region11: #{tpu_custom_call.1} parent=1 // pred_check_branch
      %38 = sbr.rel (0) target = $region13
    $region12: #{tpu_custom_call.1} parent=1 // pred_region
      %39 = dma.done [#allocation3], 2048
    $region13: #{tpu_custom_call.1} parent=1 // pred_fallthru
      _
    // Predicated region
    $region14: #{tpu_custom_call.1} parent=1 // pred_check
      _
    $region15: #{tpu_custom_call.1} parent=1 // pred_check_branch
      %41 = sbr.rel (0) target = $region17
    $region16: #{tpu_custom_call.1} parent=1 // pred_region
      %42 = dma.done [#allocation6], 8192
    $region17: #{tpu_custom_call.1} parent=1 // pred_fallthru
      _
    %p43 = scmp.eq.s32.totalorder 0, 0
    // Predicated region
    $region18: #{tpu_custom_call.1} parent=1 // pred_check
      %p44 = pneg %p43
    $region19: #{tpu_custom_call.1} parent=1 // pred_check_branch
      %46 = sbr.rel (%p44) target = $region21
    $region20: #{tpu_custom_call.1} parent=1 // pred_region
      %47 = vst [vmem:[#allocation7] sm:$0xf] 0.0
      %48 = vst [vmem:[#allocation8] sm:$0xf] 0.0
    $region21: #{tpu_custom_call.1} parent=1 // pred_fallthru
      _
    %v49 = vld [vmem:[#allocation7] sm:$0xf]
    %v50 = vld [vmem:[#allocation8] sm:$0xf]
    %v51 = vld [vmem:[#allocation2] sm:$0xff]
    %v52 = vld [vmem:[#allocation2 + $0x8] sm:$0xff]
    %v53 = vld [vmem:[#allocation5] sm:$0xff]
    %v54 = vld [vmem:[#allocation5 + $0x8] sm:$0xff]
    %v55 = vld [vmem:[#allocation5 + $0x10] sm:$0xff]
    %v56 = vld [vmem:[#allocation5 + $0x18] sm:$0xff]
    %v57 = vld [vmem:[#allocation5 + $0x20] sm:$0xff]
    %v58 = vld [vmem:[#allocation5 + $0x28] sm:$0xff]
    %v59 = vld [vmem:[#allocation5 + $0x30] sm:$0xff]
    %v60 = vld [vmem:[#allocation5 + $0x38] sm:$0xff]
    %v61 = vld [vmem:[#allocation5 + $0x40] sm:$0xff]
    %v62 = vld [vmem:[#allocation5 + $0x48] sm:$0xff]
    %v63 = vld [vmem:[#allocation5 + $0x50] sm:$0xff]
    %v64 = vld [vmem:[#allocation5 + $0x58] sm:$0xff]
    %v65 = vld [vmem:[#allocation5 + $0x60] sm:$0xff]
    %v66 = vld [vmem:[#allocation5 + $0x68] sm:$0xff]
    %v67 = vld [vmem:[#allocation5 + $0x70] sm:$0xff]
    %v68 = vld [vmem:[#allocation5 + $0x78] sm:$0xff]
    %v69 = vld [vmem:[#allocation5 + $0x80] sm:$0xff]
    %v70 = vld [vmem:[#allocation5 + $0x88] sm:$0xff]
    %v71 = vld [vmem:[#allocation5 + $0x90] sm:$0xff]
    %v72 = vld [vmem:[#allocation5 + $0x98] sm:$0xff]
    %v73 = vld [vmem:[#allocation5 + $0xa0] sm:$0xff]
    %v74 = vld [vmem:[#allocation5 + $0xa8] sm:$0xff]
    %v75 = vld [vmem:[#allocation5 + $0xb0] sm:$0xff]
    %v76 = vld [vmem:[#allocation5 + $0xb8] sm:$0xff]
    %v77 = vld [vmem:[#allocation5 + $0xc0] sm:$0xff]
    %v78 = vld [vmem:[#allocation5 + $0xc8] sm:$0xff]
    %v79 = vld [vmem:[#allocation5 + $0xd0] sm:$0xff]
    %v80 = vld [vmem:[#allocation5 + $0xd8] sm:$0xff]
    %v81 = vld [vmem:[#allocation5 + $0xe0] sm:$0xff]
    %v82 = vld [vmem:[#allocation5 + $0xe8] sm:$0xff]
    %v83 = vld [vmem:[#allocation5 + $0xf0] sm:$0xff]
    %v84 = vld [vmem:[#allocation5 + $0xf8] sm:$0xff]
    %v85 = vld [vmem:[#allocation5 + $0x100] sm:$0xff]
    %v86 = vld [vmem:[#allocation5 + $0x108] sm:$0xff]
    %v87 = vld [vmem:[#allocation5 + $0x110] sm:$0xff]
    %v88 = vld [vmem:[#allocation5 + $0x118] sm:$0xff]
    %v89 = vld [vmem:[#allocation5 + $0x120] sm:$0xff]
    %v90 = vld [vmem:[#allocation5 + $0x128] sm:$0xff]
    %v91 = vld [vmem:[#allocation5 + $0x130] sm:$0xff]
    %v92 = vld [vmem:[#allocation5 + $0x138] sm:$0xff]
    %v93 = vld [vmem:[#allocation5 + $0x140] sm:$0xff]
    %v94 = vld [vmem:[#allocation5 + $0x148] sm:$0xff]
    %v95 = vld [vmem:[#allocation5 + $0x150] sm:$0xff]
    %v96 = vld [vmem:[#allocation5 + $0x158] sm:$0xff]
    %v97 = vld [vmem:[#allocation5 + $0x160] sm:$0xff]
    %v98 = vld [vmem:[#allocation5 + $0x168] sm:$0xff]
    %v99 = vld [vmem:[#allocation5 + $0x170] sm:$0xff]
    %v100 = vld [vmem:[#allocation5 + $0x178] sm:$0xff]
    %v101 = vld [vmem:[#allocation5 + $0x180] sm:$0xff]
    %v102 = vld [vmem:[#allocation5 + $0x188] sm:$0xff]
    %v103 = vld [vmem:[#allocation5 + $0x190] sm:$0xff]
    %v104 = vld [vmem:[#allocation5 + $0x198] sm:$0xff]
    %v105 = vld [vmem:[#allocation5 + $0x1a0] sm:$0xff]
    %v106 = vld [vmem:[#allocation5 + $0x1a8] sm:$0xff]
    %v107 = vld [vmem:[#allocation5 + $0x1b0] sm:$0xff]
    %v108 = vld [vmem:[#allocation5 + $0x1b8] sm:$0xff]
    %v109 = vld [vmem:[#allocation5 + $0x1c0] sm:$0xff]
    %v110 = vld [vmem:[#allocation5 + $0x1c8] sm:$0xff]
    %v111 = vld [vmem:[#allocation5 + $0x1d0] sm:$0xff]
    %v112 = vld [vmem:[#allocation5 + $0x1d8] sm:$0xff]
    %v113 = vld [vmem:[#allocation5 + $0x1e0] sm:$0xff]
    %v114 = vld [vmem:[#allocation5 + $0x1e8] sm:$0xff]
    %v115 = vld [vmem:[#allocation5 + $0x1f0] sm:$0xff]
    %v116 = vld [vmem:[#allocation5 + $0x1f8] sm:$0xff]
    %117 = vmatprep.subr.mxu0 %v54
    %118 = vmatpush1.msra.mxu0 %v53
    %119 = vmatprep.subr.mxu0 %v58
    %120 = vmatpush1.msra.mxu0 %v57
    %121 = vmatprep.subr.mxu0 %v62
    %122 = vmatpush1.msra.mxu0 %v61
    %123 = vmatprep.subr.mxu0 %v66
    %124 = vmatpush1.msra.mxu0 %v65
    %125 = vmatprep.subr.mxu0 %v70
    %126 = vmatpush1.msra.mxu0 %v69
    %127 = vmatprep.subr.mxu0 %v74
    %128 = vmatpush1.msra.mxu0 %v73
    %129 = vmatprep.subr.mxu0 %v78
    %130 = vmatpush1.msra.mxu0 %v77
    %131 = vmatprep.subr.mxu0 %v82
    %132 = vmatpush1.msra.mxu0 %v81
    %133 = vmatprep.subr.mxu0 %v86
    %134 = vmatpush1.msra.mxu0 %v85
    %135 = vmatprep.subr.mxu0 %v90
    %136 = vmatpush1.msra.mxu0 %v89
    %137 = vmatprep.subr.mxu0 %v94
    %138 = vmatpush1.msra.mxu0 %v93
    %139 = vmatprep.subr.mxu0 %v98
    %140 = vmatpush1.msra.mxu0 %v97
    %141 = vmatprep.subr.mxu0 %v102
    %142 = vmatpush1.msra.mxu0 %v101
    %143 = vmatprep.subr.mxu0 %v106
    %144 = vmatpush1.msra.mxu0 %v105
    %145 = vmatprep.subr.mxu0 %v110
    %146 = vmatpush1.msra.mxu0 %v109
    %147 = vmatprep.subr.mxu0 %v114
    %148 = vmatpush1.msra.mxu0 %v113
    %149 = vmatprep.subr.mxu0 0.0
    %150 = vmatpush1.msra.mxu0 0.0
    %151 = vmatprep.subr.mxu0 0.0
    %152 = vmatpush1.msra.mxu0 0.0
    %153 = vmatprep.subr.mxu0 0.0
    %154 = vmatpush1.msra.mxu0 0.0
    %155 = vmatprep.subr.mxu0 0.0
    %156 = vmatpush1.msra.mxu0 0.0
    %157 = vmatprep.subr.mxu0 0.0
    %158 = vmatpush1.msra.mxu0 0.0
    %159 = vmatprep.subr.mxu0 0.0
    %160 = vmatpush1.msra.mxu0 0.0
    %161 = vmatprep.subr.mxu0 0.0
    %162 = vmatpush1.msra.mxu0 0.0
    %163 = vmatprep.subr.mxu0 0.0
    %164 = vmatpush1.msra.mxu0 0.0
    %165 = vmatprep.subr.mxu0 0.0
    %166 = vmatpush1.msra.mxu0 0.0
    %167 = vmatprep.subr.mxu0 0.0
    %168 = vmatpush1.msra.mxu0 0.0
    %169 = vmatprep.subr.mxu0 0.0
    %170 = vmatpush1.msra.mxu0 0.0
    %171 = vmatprep.subr.mxu0 0.0
    %172 = vmatpush1.msra.mxu0 0.0
    %173 = vmatprep.subr.mxu0 0.0
    %174 = vmatpush1.msra.mxu0 0.0
    %175 = vmatprep.subr.mxu0 0.0
    %176 = vmatpush1.msra.mxu0 0.0
    %177 = vmatprep.subr.mxu0 0.0
    %178 = vmatpush1.msra.mxu0 0.0
    %179 = vmatprep.subr.mxu0 0.0
    %180 = vmatpush1.msra.mxu0 0.0
    %181 = vmatprep.mubr.f32.mxu0 0.0
    %182 = vmatmul.mubr.f32.gmra.mrb[0].mxu0 %v49
    %v183 = vpop.f32.mrb[0].mxu0
    %v184 = vadd.f32 0.0, %v183
    %v185 = vpop.f32.mrb[0].mxu0
    %v186 = vadd.f32 0.0, %v185
    %187 = vdwg.mxu0
    %188 = vmatprep.subr.mxu0 %v56
    %189 = vmatpush1.msra.mxu0 %v55
    %190 = vmatprep.subr.mxu0 %v60
    %191 = vmatpush1.msra.mxu0 %v59
    %192 = vmatprep.subr.mxu0 %v64
    %193 = vmatpush1.msra.mxu0 %v63
    %194 = vmatprep.subr.mxu0 %v68
    %195 = vmatpush1.msra.mxu0 %v67
    %196 = vmatprep.subr.mxu0 %v72
    %197 = vmatpush1.msra.mxu0 %v71
    %198 = vmatprep.subr.mxu0 %v76
    %199 = vmatpush1.msra.mxu0 %v75
    %200 = vmatprep.subr.mxu0 %v80
    %201 = vmatpush1.msra.mxu0 %v79
    %202 = vmatprep.subr.mxu0 %v84
    %203 = vmatpush1.msra.mxu0 %v83
    %204 = vmatprep.subr.mxu0 %v88
    %205 = vmatpush1.msra.mxu0 %v87
    %206 = vmatprep.subr.mxu0 %v92
    %207 = vmatpush1.msra.mxu0 %v91
    %208 = vmatprep.subr.mxu0 %v96
    %209 = vmatpush1.msra.mxu0 %v95
    %210 = vmatprep.subr.mxu0 %v100
    %211 = vmatpush1.msra.mxu0 %v99
    %212 = vmatprep.subr.mxu0 %v104
    %213 = vmatpush1.msra.mxu0 %v103
    %214 = vmatprep.subr.mxu0 %v108
    %215 = vmatpush1.msra.mxu0 %v107
    %216 = vmatprep.subr.mxu0 %v112
    %217 = vmatpush1.msra.mxu0 %v111
    %218 = vmatprep.subr.mxu0 %v116
    %219 = vmatpush1.msra.mxu0 %v115
    %220 = vmatprep.subr.mxu0 0.0
    %221 = vmatpush1.msra.mxu0 0.0
    %222 = vmatprep.subr.mxu0 0.0
    %223 = vmatpush1.msra.mxu0 0.0
    %224 = vmatprep.subr.mxu0 0.0
    %225 = vmatpush1.msra.mxu0 0.0
    %226 = vmatprep.subr.mxu0 0.0
    %227 = vmatpush1.msra.mxu0 0.0
    %228 = vmatprep.subr.mxu0 0.0
    %229 = vmatpush1.msra.mxu0 0.0
    %230 = vmatprep.subr.mxu0 0.0
    %231 = vmatpush1.msra.mxu0 0.0
    %232 = vmatprep.subr.mxu0 0.0
    %233 = vmatpush1.msra.mxu0 0.0
    %234 = vmatprep.subr.mxu0 0.0
    %235 = vmatpush1.msra.mxu0 0.0
    %236 = vmatprep.subr.mxu0 0.0
    %237 = vmatpush1.msra.mxu0 0.0
    %238 = vmatprep.subr.mxu0 0.0
    %239 = vmatpush1.msra.mxu0 0.0
    %240 = vmatprep.subr.mxu0 0.0
    %241 = vmatpush1.msra.mxu0 0.0
    %242 = vmatprep.subr.mxu0 0.0
    %243 = vmatpush1.msra.mxu0 0.0
    %244 = vmatprep.subr.mxu0 0.0
    %245 = vmatpush1.msra.mxu0 0.0
    %246 = vmatprep.subr.mxu0 0.0
    %247 = vmatpush1.msra.mxu0 0.0
    %248 = vmatprep.subr.mxu0 0.0
    %249 = vmatpush1.msra.mxu0 0.0
    %250 = vmatprep.subr.mxu0 0.0
    %251 = vmatpush1.msra.mxu0 0.0
    %252 = vmatprep.mubr.f32.mxu0 0.0
    %253 = vmatmul.mubr.f32.gmra.mrb[0].mxu0 %v49
    %v254 = vpop.f32.mrb[0].mxu0
    %v255 = vadd.f32 0.0, %v254
    %v256 = vpop.f32.mrb[0].mxu0
    %v257 = vadd.f32 0.0, %v256
    %258 = vdwg.mxu0
    %v263 = vcombine.low %v184, %v186
    %v264 = vcombine.low %v255, %v257
    %v267 = vadd.f32 %v51, %v263
    %v268 = vadd.f32 %v52, %v264
    %v269 = vmul.f32 %v267, 0.5
    %v270 = vtanh.pop %v269
    %v271 = vadd.f32 %v270, 1.0
    %v272 = vmul.f32 %v271, 0.5
    %v274 = vrot.slane %v267, 4
    %v276 = vmul.f32 %v274, 0.5
    %v277 = vtanh.pop %v276
    %v278 = vadd.f32 %v277, 1.0
    %v279 = vmul.f32 %v278, 0.5
    %v280 = vtanh.pop %v268
    %v282 = vrot.slane %v268, 4
    %v284 = vmul.f32 %v282, 0.5
    %v285 = vtanh.pop %v284
    %v286 = vadd.f32 %v285, 1.0
    %v287 = vmul.f32 %v286, 0.5
    %v288 = vmul.f32 %v279, %v50
    %v289 = vmul.f32 %v272, %v280
    %v290 = vadd.f32 %v288, %v289
    %v291 = vtanh.pop %v290
    %v292 = vmul.f32 %v287, %v291
    %s293 = scalar_lea.vmem [#allocation2], 16
    %v294 = vld [vmem:[%s293] sm:$0xff]
    %v295 = vld [vmem:[%s293 + $0x8] sm:$0xff]
    %296 = vmatprep.subr.mxu0 %v54
    %297 = vmatpush1.msra.mxu0 %v53
    %298 = vmatprep.subr.mxu0 %v58
    %299 = vmatpush1.msra.mxu0 %v57
    %300 = vmatprep.subr.mxu0 %v62
    %301 = vmatpush1.msra.mxu0 %v61
    %302 = vmatprep.subr.mxu0 %v66
    %303 = vmatpush1.msra.mxu0 %v65
    %304 = vmatprep.subr.mxu0 %v70
    %305 = vmatpush1.msra.mxu0 %v69
    %306 = vmatprep.subr.mxu0 %v74
    %307 = vmatpush1.msra.mxu0 %v73
    %308 = vmatprep.subr.mxu0 %v78
    %309 = vmatpush1.msra.mxu0 %v77
    %310 = vmatprep.subr.mxu0 %v82
    %311 = vmatpush1.msra.mxu0 %v81
    %312 = vmatprep.subr.mxu0 %v86
    %313 = vmatpush1.msra.mxu0 %v85
    %314 = vmatprep.subr.mxu0 %v90
    %315 = vmatpush1.msra.mxu0 %v89
    %316 = vmatprep.subr.mxu0 %v94
    %317 = vmatpush1.msra.mxu0 %v93
    %318 = vmatprep.subr.mxu0 %v98
    %319 = vmatpush1.msra.mxu0 %v97
    %320 = vmatprep.subr.mxu0 %v102
    %321 = vmatpush1.msra.mxu0 %v101
    %322 = vmatprep.subr.mxu0 %v106
    %323 = vmatpush1.msra.mxu0 %v105
    %324 = vmatprep.subr.mxu0 %v110
    %325 = vmatpush1.msra.mxu0 %v109
    %326 = vmatprep.subr.mxu0 %v114
    %327 = vmatpush1.msra.mxu0 %v113
    %328 = vmatprep.subr.mxu0 0.0
    %329 = vmatpush1.msra.mxu0 0.0
    %330 = vmatprep.subr.mxu0 0.0
    %331 = vmatpush1.msra.mxu0 0.0
    %332 = vmatprep.subr.mxu0 0.0
    %333 = vmatpush1.msra.mxu0 0.0
    %334 = vmatprep.subr.mxu0 0.0
    %335 = vmatpush1.msra.mxu0 0.0
    %336 = vmatprep.subr.mxu0 0.0
    %337 = vmatpush1.msra.mxu0 0.0
    %338 = vmatprep.subr.mxu0 0.0
    %339 = vmatpush1.msra.mxu0 0.0
    %340 = vmatprep.subr.mxu0 0.0
    %341 = vmatpush1.msra.mxu0 0.0
    %342 = vmatprep.subr.mxu0 0.0
    %343 = vmatpush1.msra.mxu0 0.0
    %344 = vmatprep.subr.mxu0 0.0
    %345 = vmatpush1.msra.mxu0 0.0
    %346 = vmatprep.subr.mxu0 0.0
    %347 = vmatpush1.msra.mxu0 0.0
    %348 = vmatprep.subr.mxu0 0.0
    %349 = vmatpush1.msra.mxu0 0.0
    %350 = vmatprep.subr.mxu0 0.0
    %351 = vmatpush1.msra.mxu0 0.0
    %352 = vmatprep.subr.mxu0 0.0
    %353 = vmatpush1.msra.mxu0 0.0
    %354 = vmatprep.subr.mxu0 0.0
    %355 = vmatpush1.msra.mxu0 0.0
    %356 = vmatprep.subr.mxu0 0.0
    %357 = vmatpush1.msra.mxu0 0.0
    %358 = vmatprep.subr.mxu0 0.0
    %359 = vmatpush1.msra.mxu0 0.0
    %360 = vmatprep.mubr.f32.mxu0 0.0
    %361 = vmatmul.mubr.f32.gmra.mrb[0].mxu0 %v292
    %v362 = vpop.f32.mrb[0].mxu0
    %v363 = vadd.f32 0.0, %v362
    %v364 = vpop.f32.mrb[0].mxu0
    %v365 = vadd.f32 0.0, %v364
    %366 = vdwg.mxu0
    %367 = vmatprep.subr.mxu0 %v56
    %368 = vmatpush1.msra.mxu0 %v55
    %369 = vmatprep.subr.mxu0 %v60
    %370 = vmatpush1.msra.mxu0 %v59
    %371 = vmatprep.subr.mxu0 %v64
    %372 = vmatpush1.msra.mxu0 %v63
    %373 = vmatprep.subr.mxu0 %v68
    %374 = vmatpush1.msra.mxu0 %v67
    %375 = vmatprep.subr.mxu0 %v72
    %376 = vmatpush1.msra.mxu0 %v71
    %377 = vmatprep.subr.mxu0 %v76
    %378 = vmatpush1.msra.mxu0 %v75
    %379 = vmatprep.subr.mxu0 %v80
    %380 = vmatpush1.msra.mxu0 %v79
    %381 = vmatprep.subr.mxu0 %v84
    %382 = vmatpush1.msra.mxu0 %v83
    %383 = vmatprep.subr.mxu0 %v88
    %384 = vmatpush1.msra.mxu0 %v87
    %385 = vmatprep.subr.mxu0 %v92
    %386 = vmatpush1.msra.mxu0 %v91
    %387 = vmatprep.subr.mxu0 %v96
    %388 = vmatpush1.msra.mxu0 %v95
    %389 = vmatprep.subr.mxu0 %v100
    %390 = vmatpush1.msra.mxu0 %v99
    %391 = vmatprep.subr.mxu0 %v104
    %392 = vmatpush1.msra.mxu0 %v103
    %393 = vmatprep.subr.mxu0 %v108
    %394 = vmatpush1.msra.mxu0 %v107
    %395 = vmatprep.subr.mxu0 %v112
    %396 = vmatpush1.msra.mxu0 %v111
    %397 = vmatprep.subr.mxu0 %v116
    %398 = vmatpush1.msra.mxu0 %v115
    %399 = vmatprep.subr.mxu0 0.0
    %400 = vmatpush1.msra.mxu0 0.0
    %401 = vmatprep.subr.mxu0 0.0
    %402 = vmatpush1.msra.mxu0 0.0
    %403 = vmatprep.subr.mxu0 0.0
    %404 = vmatpush1.msra.mxu0 0.0
    %405 = vmatprep.subr.mxu0 0.0
    %406 = vmatpush1.msra.mxu0 0.0
    %407 = vmatprep.subr.mxu0 0.0
    %408 = vmatpush1.msra.mxu0 0.0
    %409 = vmatprep.subr.mxu0 0.0
    %410 = vmatpush1.msra.mxu0 0.0
    %411 = vmatprep.subr.mxu0 0.0
    %412 = vmatpush1.msra.mxu0 0.0
    %413 = vmatprep.subr.mxu0 0.0
    %414 = vmatpush1.msra.mxu0 0.0
    %415 = vmatprep.subr.mxu0 0.0
    %416 = vmatpush1.msra.mxu0 0.0
    %417 = vmatprep.subr.mxu0 0.0
    %418 = vmatpush1.msra.mxu0 0.0
    %419 = vmatprep.subr.mxu0 0.0
    %420 = vmatpush1.msra.mxu0 0.0
    %421 = vmatprep.subr.mxu0 0.0
    %422 = vmatpush1.msra.mxu0 0.0
    %423 = vmatprep.subr.mxu0 0.0
    %424 = vmatpush1.msra.mxu0 0.0
    %425 = vmatprep.subr.mxu0 0.0
    %426 = vmatpush1.msra.mxu0 0.0
    %427 = vmatprep.subr.mxu0 0.0
    %428 = vmatpush1.msra.mxu0 0.0
    %429 = vmatprep.subr.mxu0 0.0
    %430 = vmatpush1.msra.mxu0 0.0
    %431 = vmatprep.mubr.f32.mxu0 0.0
    %432 = vmatmul.mubr.f32.gmra.mrb[0].mxu0 %v292
    %v433 = vpop.f32.mrb[0].mxu0
    %v434 = vadd.f32 0.0, %v433
    %v435 = vpop.f32.mrb[0].mxu0
    %v436 = vadd.f32 0.0, %v435
    %437 = vdwg.mxu0
    %v442 = vcombine.low %v363, %v365
    %v443 = vcombine.low %v434, %v436
    %v446 = vadd.f32 %v294, %v442
    %v447 = vadd.f32 %v295, %v443
    %v448 = vmul.f32 %v446, 0.5
    %v449 = vtanh.pop %v448
    %v450 = vadd.f32 %v449, 1.0
    %v451 = vmul.f32 %v450, 0.5
    %v453 = vrot.slane %v446, 4
    %v455 = vmul.f32 %v453, 0.5
    %v456 = vtanh.pop %v455
    %v457 = vadd.f32 %v456, 1.0
    %v458 = vmul.f32 %v457, 0.5
    %v459 = vtanh.pop %v447
    %v461 = vrot.slane %v447, 4
    %v463 = vmul.f32 %v461, 0.5
    %v464 = vtanh.pop %v463
    %v465 = vadd.f32 %v464, 1.0
    %v466 = vmul.f32 %v465, 0.5
    %v467 = vmul.f32 %v458, %v290
    %v468 = vmul.f32 %v451, %v459
    %v469 = vadd.f32 %v467, %v468
    %v470 = vtanh.pop %v469
    %v471 = vmul.f32 %v466, %v470
    %s472 = scalar_lea.vmem [#allocation2], 32
    %v473 = vld [vmem:[%s472] sm:$0xff]
    %v474 = vld [vmem:[%s472 + $0x8] sm:$0xff]
    %475 = vmatprep.subr.mxu0 %v54
    %476 = vmatpush1.msra.mxu0 %v53
    %477 = vmatprep.subr.mxu0 %v58
    %478 = vmatpush1.msra.mxu0 %v57
    %479 = vmatprep.subr.mxu0 %v62
    %480 = vmatpush1.msra.mxu0 %v61
    %481 = vmatprep.subr.mxu0 %v66
    %482 = vmatpush1.msra.mxu0 %v65
    %483 = vmatprep.subr.mxu0 %v70
    %484 = vmatpush1.msra.mxu0 %v69
    %485 = vmatprep.subr.mxu0 %v74
    %486 = vmatpush1.msra.mxu0 %v73
    %487 = vmatprep.subr.mxu0 %v78
    %488 = vmatpush1.msra.mxu0 %v77
    %489 = vmatprep.subr.mxu0 %v82
    %490 = vmatpush1.msra.mxu0 %v81
    %491 = vmatprep.subr.mxu0 %v86
    %492 = vmatpush1.msra.mxu0 %v85
    %493 = vmatprep.subr.mxu0 %v90
    %494 = vmatpush1.msra.mxu0 %v89
    %495 = vmatprep.subr.mxu0 %v94
    %496 = vmatpush1.msra.mxu0 %v93
    %497 = vmatprep.subr.mxu0 %v98
    %498 = vmatpush1.msra.mxu0 %v97
    %499 = vmatprep.subr.mxu0 %v102
    %500 = vmatpush1.msra.mxu0 %v101
    %501 = vmatprep.subr.mxu0 %v106
    %502 = vmatpush1.msra.mxu0 %v105
    %503 = vmatprep.subr.mxu0 %v110
    %504 = vmatpush1.msra.mxu0 %v109
    %505 = vmatprep.subr.mxu0 %v114
    %506 = vmatpush1.msra.mxu0 %v113
    %507 = vmatprep.subr.mxu0 0.0
    %508 = vmatpush1.msra.mxu0 0.0
    %509 = vmatprep.subr.mxu0 0.0
    %510 = vmatpush1.msra.mxu0 0.0
    %511 = vmatprep.subr.mxu0 0.0
    %512 = vmatpush1.msra.mxu0 0.0
    %513 = vmatprep.subr.mxu0 0.0
    %514 = vmatpush1.msra.mxu0 0.0
    %515 = vmatprep.subr.mxu0 0.0
    %516 = vmatpush1.msra.mxu0 0.0
    %517 = vmatprep.subr.mxu0 0.0
    %518 = vmatpush1.msra.mxu0 0.0
    %519 = vmatprep.subr.mxu0 0.0
    %520 = vmatpush1.msra.mxu0 0.0
    %521 = vmatprep.subr.mxu0 0.0
    %522 = vmatpush1.msra.mxu0 0.0
    %523 = vmatprep.subr.mxu0 0.0
    %524 = vmatpush1.msra.mxu0 0.0
    %525 = vmatprep.subr.mxu0 0.0
    %526 = vmatpush1.msra.mxu0 0.0
    %527 = vmatprep.subr.mxu0 0.0
    %528 = vmatpush1.msra.mxu0 0.0
    %529 = vmatprep.subr.mxu0 0.0
    %530 = vmatpush1.msra.mxu0 0.0
    %531 = vmatprep.subr.mxu0 0.0
    %532 = vmatpush1.msra.mxu0 0.0
    %533 = vmatprep.subr.mxu0 0.0
    %534 = vmatpush1.msra.mxu0 0.0
    %535 = vmatprep.subr.mxu0 0.0
    %536 = vmatpush1.msra.mxu0 0.0
    %537 = vmatprep.subr.mxu0 0.0
    %538 = vmatpush1.msra.mxu0 0.0
    %539 = vmatprep.mubr.f32.mxu0 0.0
    %540 = vmatmul.mubr.f32.gmra.mrb[0].mxu0 %v471
    %v541 = vpop.f32.mrb[0].mxu0
    %v542 = vadd.f32 0.0, %v541
    %v543 = vpop.f32.mrb[0].mxu0
    %v544 = vadd.f32 0.0, %v543
    %545 = vdwg.mxu0
    %546 = vmatprep.subr.mxu0 %v56
    %547 = vmatpush1.msra.mxu0 %v55
    %548 = vmatprep.subr.mxu0 %v60
    %549 = vmatpush1.msra.mxu0 %v59
    %550 = vmatprep.subr.mxu0 %v64
    %551 = vmatpush1.msra.mxu0 %v63
    %552 = vmatprep.subr.mxu0 %v68
    %553 = vmatpush1.msra.mxu0 %v67
    %554 = vmatprep.subr.mxu0 %v72
    %555 = vmatpush1.msra.mxu0 %v71
    %556 = vmatprep.subr.mxu0 %v76
    %557 = vmatpush1.msra.mxu0 %v75
    %558 = vmatprep.subr.mxu0 %v80
    %559 = vmatpush1.msra.mxu0 %v79
    %560 = vmatprep.subr.mxu0 %v84
    %561 = vmatpush1.msra.mxu0 %v83
    %562 = vmatprep.subr.mxu0 %v88
    %563 = vmatpush1.msra.mxu0 %v87
    %564 = vmatprep.subr.mxu0 %v92
    %565 = vmatpush1.msra.mxu0 %v91
    %566 = vmatprep.subr.mxu0 %v96
    %567 = vmatpush1.msra.mxu0 %v95
    %568 = vmatprep.subr.mxu0 %v100
    %569 = vmatpush1.msra.mxu0 %v99
    %570 = vmatprep.subr.mxu0 %v104
    %571 = vmatpush1.msra.mxu0 %v103
    %572 = vmatprep.subr.mxu0 %v108
    %573 = vmatpush1.msra.mxu0 %v107
    %574 = vmatprep.subr.mxu0 %v112
    %575 = vmatpush1.msra.mxu0 %v111
    %576 = vmatprep.subr.mxu0 %v116
    %577 = vmatpush1.msra.mxu0 %v115
    %578 = vmatprep.subr.mxu0 0.0
    %579 = vmatpush1.msra.mxu0 0.0
    %580 = vmatprep.subr.mxu0 0.0
    %581 = vmatpush1.msra.mxu0 0.0
    %582 = vmatprep.subr.mxu0 0.0
    %583 = vmatpush1.msra.mxu0 0.0
    %584 = vmatprep.subr.mxu0 0.0
    %585 = vmatpush1.msra.mxu0 0.0
    %586 = vmatprep.subr.mxu0 0.0
    %587 = vmatpush1.msra.mxu0 0.0
    %588 = vmatprep.subr.mxu0 0.0
    %589 = vmatpush1.msra.mxu0 0.0
    %590 = vmatprep.subr.mxu0 0.0
    %591 = vmatpush1.msra.mxu0 0.0
    %592 = vmatprep.subr.mxu0 0.0
    %593 = vmatpush1.msra.mxu0 0.0
    %594 = vmatprep.subr.mxu0 0.0
    %595 = vmatpush1.msra.mxu0 0.0
    %596 = vmatprep.subr.mxu0 0.0
    %597 = vmatpush1.msra.mxu0 0.0
    %598 = vmatprep.subr.mxu0 0.0
    %599 = vmatpush1.msra.mxu0 0.0
    %600 = vmatprep.subr.mxu0 0.0
    %601 = vmatpush1.msra.mxu0 0.0
    %602 = vmatprep.subr.mxu0 0.0
    %603 = vmatpush1.msra.mxu0 0.0
    %604 = vmatprep.subr.mxu0 0.0
    %605 = vmatpush1.msra.mxu0 0.0
    %606 = vmatprep.subr.mxu0 0.0
    %607 = vmatpush1.msra.mxu0 0.0
    %608 = vmatprep.subr.mxu0 0.0
    %609 = vmatpush1.msra.mxu0 0.0
    %610 = vmatprep.mubr.f32.mxu0 0.0
    %611 = vmatmul.mubr.f32.gmra.mrb[0].mxu0 %v471
    %v612 = vpop.f32.mrb[0].mxu0
    %v613 = vadd.f32 0.0, %v612
    %v614 = vpop.f32.mrb[0].mxu0
    %v615 = vadd.f32 0.0, %v614
    %616 = vdwg.mxu0
    %v621 = vcombine.low %v542, %v544
    %v622 = vcombine.low %v613, %v615
    %v625 = vadd.f32 %v473, %v621
    %v626 = vadd.f32 %v474, %v622
    %v627 = vmul.f32 %v625, 0.5
    %v628 = vtanh.pop %v627
    %v629 = vadd.f32 %v628, 1.0
    %v630 = vmul.f32 %v629, 0.5
    %v632 = vrot.slane %v625, 4
    %v634 = vmul.f32 %v632, 0.5
    %v635 = vtanh.pop %v634
    %v636 = vadd.f32 %v635, 1.0
    %v637 = vmul.f32 %v636, 0.5
    %v638 = vtanh.pop %v626
    %v640 = vrot.slane %v626, 4
    %v642 = vmul.f32 %v640, 0.5
    %v643 = vtanh.pop %v642
    %v644 = vadd.f32 %v643, 1.0
    %v645 = vmul.f32 %v644, 0.5
    %v646 = vmul.f32 %v637, %v469
    %v647 = vmul.f32 %v630, %v638
    %v648 = vadd.f32 %v646, %v647
    %v649 = vtanh.pop %v648
    %v650 = vmul.f32 %v645, %v649
    %s651 = scalar_lea.vmem [#allocation2], 48
    %v652 = vld [vmem:[%s651] sm:$0xff]
    %v653 = vld [vmem:[%s651 + $0x8] sm:$0xff]
    %654 = vmatprep.subr.mxu0 %v54
    %655 = vmatpush1.msra.mxu0 %v53
    %656 = vmatprep.subr.mxu0 %v58
    %657 = vmatpush1.msra.mxu0 %v57
    %658 = vmatprep.subr.mxu0 %v62
    %659 = vmatpush1.msra.mxu0 %v61
    %660 = vmatprep.subr.mxu0 %v66
    %661 = vmatpush1.msra.mxu0 %v65
    %662 = vmatprep.subr.mxu0 %v70
    %663 = vmatpush1.msra.mxu0 %v69
    %664 = vmatprep.subr.mxu0 %v74
    %665 = vmatpush1.msra.mxu0 %v73
    %666 = vmatprep.subr.mxu0 %v78
    %667 = vmatpush1.msra.mxu0 %v77
    %668 = vmatprep.subr.mxu0 %v82
    %669 = vmatpush1.msra.mxu0 %v81
    %670 = vmatprep.subr.mxu0 %v86
    %671 = vmatpush1.msra.mxu0 %v85
    %672 = vmatprep.subr.mxu0 %v90
    %673 = vmatpush1.msra.mxu0 %v89
    %674 = vmatprep.subr.mxu0 %v94
    %675 = vmatpush1.msra.mxu0 %v93
    %676 = vmatprep.subr.mxu0 %v98
    %677 = vmatpush1.msra.mxu0 %v97
    %678 = vmatprep.subr.mxu0 %v102
    %679 = vmatpush1.msra.mxu0 %v101
    %680 = vmatprep.subr.mxu0 %v106
    %681 = vmatpush1.msra.mxu0 %v105
    %682 = vmatprep.subr.mxu0 %v110
    %683 = vmatpush1.msra.mxu0 %v109
    %684 = vmatprep.subr.mxu0 %v114
    %685 = vmatpush1.msra.mxu0 %v113
    %686 = vmatprep.subr.mxu0 0.0
    %687 = vmatpush1.msra.mxu0 0.0
    %688 = vmatprep.subr.mxu0 0.0
    %689 = vmatpush1.msra.mxu0 0.0
    %690 = vmatprep.subr.mxu0 0.0
    %691 = vmatpush1.msra.mxu0 0.0
    %692 = vmatprep.subr.mxu0 0.0
    %693 = vmatpush1.msra.mxu0 0.0
    %694 = vmatprep.subr.mxu0 0.0
    %695 = vmatpush1.msra.mxu0 0.0
    %696 = vmatprep.subr.mxu0 0.0
    %697 = vmatpush1.msra.mxu0 0.0
    %698 = vmatprep.subr.mxu0 0.0
    %699 = vmatpush1.msra.mxu0 0.0
    %700 = vmatprep.subr.mxu0 0.0
    %701 = vmatpush1.msra.mxu0 0.0
    %702 = vmatprep.subr.mxu0 0.0
    %703 = vmatpush1.msra.mxu0 0.0
    %704 = vmatprep.subr.mxu0 0.0
    %705 = vmatpush1.msra.mxu0 0.0
    %706 = vmatprep.subr.mxu0 0.0
    %707 = vmatpush1.msra.mxu0 0.0
    %708 = vmatprep.subr.mxu0 0.0
    %709 = vmatpush1.msra.mxu0 0.0
    %710 = vmatprep.subr.mxu0 0.0
    %711 = vmatpush1.msra.mxu0 0.0
    %712 = vmatprep.subr.mxu0 0.0
    %713 = vmatpush1.msra.mxu0 0.0
    %714 = vmatprep.subr.mxu0 0.0
    %715 = vmatpush1.msra.mxu0 0.0
    %716 = vmatprep.subr.mxu0 0.0
    %717 = vmatpush1.msra.mxu0 0.0
    %718 = vmatprep.mubr.f32.mxu0 0.0
    %719 = vmatmul.mubr.f32.gmra.mrb[0].mxu0 %v650
    %v720 = vpop.f32.mrb[0].mxu0
    %v721 = vadd.f32 0.0, %v720
    %v722 = vpop.f32.mrb[0].mxu0
    %v723 = vadd.f32 0.0, %v722
    %724 = vdwg.mxu0
    %725 = vmatprep.subr.mxu0 %v56
    %726 = vmatpush1.msra.mxu0 %v55
    %727 = vmatprep.subr.mxu0 %v60
    %728 = vmatpush1.msra.mxu0 %v59
    %729 = vmatprep.subr.mxu0 %v64
    %730 = vmatpush1.msra.mxu0 %v63
    %731 = vmatprep.subr.mxu0 %v68
    %732 = vmatpush1.msra.mxu0 %v67
    %733 = vmatprep.subr.mxu0 %v72
    %734 = vmatpush1.msra.mxu0 %v71
    %735 = vmatprep.subr.mxu0 %v76
    %736 = vmatpush1.msra.mxu0 %v75
    %737 = vmatprep.subr.mxu0 %v80
    %738 = vmatpush1.msra.mxu0 %v79
    %739 = vmatprep.subr.mxu0 %v84
    %740 = vmatpush1.msra.mxu0 %v83
    %741 = vmatprep.subr.mxu0 %v88
    %742 = vmatpush1.msra.mxu0 %v87
    %743 = vmatprep.subr.mxu0 %v92
    %744 = vmatpush1.msra.mxu0 %v91
    %745 = vmatprep.subr.mxu0 %v96
    %746 = vmatpush1.msra.mxu0 %v95
    %747 = vmatprep.subr.mxu0 %v100
    %748 = vmatpush1.msra.mxu0 %v99
    %749 = vmatprep.subr.mxu0 %v104
    %750 = vmatpush1.msra.mxu0 %v103
    %751 = vmatprep.subr.mxu0 %v108
    %752 = vmatpush1.msra.mxu0 %v107
    %753 = vmatprep.subr.mxu0 %v112
    %754 = vmatpush1.msra.mxu0 %v111
    %755 = vmatprep.subr.mxu0 %v116
    %756 = vmatpush1.msra.mxu0 %v115
    %757 = vmatprep.subr.mxu0 0.0
    %758 = vmatpush1.msra.mxu0 0.0
    %759 = vmatprep.subr.mxu0 0.0
    %760 = vmatpush1.msra.mxu0 0.0
    %761 = vmatprep.subr.mxu0 0.0
    %762 = vmatpush1.msra.mxu0 0.0
    %763 = vmatprep.subr.mxu0 0.0
    %764 = vmatpush1.msra.mxu0 0.0
    %765 = vmatprep.subr.mxu0 0.0
    %766 = vmatpush1.msra.mxu0 0.0
    %767 = vmatprep.subr.mxu0 0.0
    %768 = vmatpush1.msra.mxu0 0.0
    %769 = vmatprep.subr.mxu0 0.0
    %770 = vmatpush1.msra.mxu0 0.0
    %771 = vmatprep.subr.mxu0 0.0
    %772 = vmatpush1.msra.mxu0 0.0
    %773 = vmatprep.subr.mxu0 0.0
    %774 = vmatpush1.msra.mxu0 0.0
    %775 = vmatprep.subr.mxu0 0.0
    %776 = vmatpush1.msra.mxu0 0.0
    %777 = vmatprep.subr.mxu0 0.0
    %778 = vmatpush1.msra.mxu0 0.0
    %779 = vmatprep.subr.mxu0 0.0
    %780 = vmatpush1.msra.mxu0 0.0
    %781 = vmatprep.subr.mxu0 0.0
    %782 = vmatpush1.msra.mxu0 0.0
    %783 = vmatprep.subr.mxu0 0.0
    %784 = vmatpush1.msra.mxu0 0.0
    %785 = vmatprep.subr.mxu0 0.0
    %786 = vmatpush1.msra.mxu0 0.0
    %787 = vmatprep.subr.mxu0 0.0
    %788 = vmatpush1.msra.mxu0 0.0
    %789 = vmatprep.mubr.f32.mxu0 0.0
    %790 = vmatmul.mubr.f32.gmra.mrb[0].mxu0 %v650
    %v791 = vpop.f32.mrb[0].mxu0
    %v792 = vadd.f32 0.0, %v791
    %v793 = vpop.f32.mrb[0].mxu0
    %v794 = vadd.f32 0.0, %v793
    %795 = vdwg.mxu0
    %v800 = vcombine.low %v721, %v723
    %v801 = vcombine.low %v792, %v794
    %v804 = vadd.f32 %v652, %v800
    %v805 = vadd.f32 %v653, %v801
    %v806 = vmul.f32 %v804, 0.5
    %v807 = vtanh.pop %v806
    %v808 = vadd.f32 %v807, 1.0
    %v809 = vmul.f32 %v808, 0.5
    %v811 = vrot.slane %v804, 4
    %v813 = vmul.f32 %v811, 0.5
    %v814 = vtanh.pop %v813
    %v815 = vadd.f32 %v814, 1.0
    %v816 = vmul.f32 %v815, 0.5
    %v817 = vtanh.pop %v805
    %v819 = vrot.slane %v805, 4
    %v821 = vmul.f32 %v819, 0.5
    %v822 = vtanh.pop %v821
    %v823 = vadd.f32 %v822, 1.0
    %v824 = vmul.f32 %v823, 0.5
    %v825 = vmul.f32 %v816, %v648
    %v826 = vmul.f32 %v809, %v817
    %v827 = vadd.f32 %v825, %v826
    %v828 = vtanh.pop %v827
    %v829 = vmul.f32 %v824, %v828
    %s830 = scalar_lea.vmem [#allocation2], 64
    %v831 = vld [vmem:[%s830] sm:$0xff]
    %v832 = vld [vmem:[%s830 + $0x8] sm:$0xff]
    %833 = vmatprep.subr.mxu0 %v54
    %834 = vmatpush1.msra.mxu0 %v53
    %835 = vmatprep.subr.mxu0 %v58
    %836 = vmatpush1.msra.mxu0 %v57
    %837 = vmatprep.subr.mxu0 %v62
    %838 = vmatpush1.msra.mxu0 %v61
    %839 = vmatprep.subr.mxu0 %v66
    %840 = vmatpush1.msra.mxu0 %v65
    %841 = vmatprep.subr.mxu0 %v70
    %842 = vmatpush1.msra.mxu0 %v69
    %843 = vmatprep.subr.mxu0 %v74
    %844 = vmatpush1.msra.mxu0 %v73
    %845 = vmatprep.subr.mxu0 %v78
    %846 = vmatpush1.msra.mxu0 %v77
    %847 = vmatprep.subr.mxu0 %v82
    %848 = vmatpush1.msra.mxu0 %v81
    %849 = vmatprep.subr.mxu0 %v86
    %850 = vmatpush1.msra.mxu0 %v85
    %851 = vmatprep.subr.mxu0 %v90
    %852 = vmatpush1.msra.mxu0 %v89
    %853 = vmatprep.subr.mxu0 %v94
    %854 = vmatpush1.msra.mxu0 %v93
    %855 = vmatprep.subr.mxu0 %v98
    %856 = vmatpush1.msra.mxu0 %v97
    %857 = vmatprep.subr.mxu0 %v102
    %858 = vmatpush1.msra.mxu0 %v101
    %859 = vmatprep.subr.mxu0 %v106
    %860 = vmatpush1.msra.mxu0 %v105
    %861 = vmatprep.subr.mxu0 %v110
    %862 = vmatpush1.msra.mxu0 %v109
    %863 = vmatprep.subr.mxu0 %v114
    %864 = vmatpush1.msra.mxu0 %v113
    %865 = vmatprep.subr.mxu0 0.0
    %866 = vmatpush1.msra.mxu0 0.0
    %867 = vmatprep.subr.mxu0 0.0
    %868 = vmatpush1.msra.mxu0 0.0
    %869 = vmatprep.subr.mxu0 0.0
    %870 = vmatpush1.msra.mxu0 0.0
    %871 = vmatprep.subr.mxu0 0.0
    %872 = vmatpush1.msra.mxu0 0.0
    %873 = vmatprep.subr.mxu0 0.0
    %874 = vmatpush1.msra.mxu0 0.0
    %875 = vmatprep.subr.mxu0 0.0
    %876 = vmatpush1.msra.mxu0 0.0
    %877 = vmatprep.subr.mxu0 0.0
    %878 = vmatpush1.msra.mxu0 0.0
    %879 = vmatprep.subr.mxu0 0.0
    %880 = vmatpush1.msra.mxu0 0.0
    %881 = vmatprep.subr.mxu0 0.0
    %882 = vmatpush1.msra.mxu0 0.0
    %883 = vmatprep.subr.mxu0 0.0
    %884 = vmatpush1.msra.mxu0 0.0
    %885 = vmatprep.subr.mxu0 0.0
    %886 = vmatpush1.msra.mxu0 0.0
    %887 = vmatprep.subr.mxu0 0.0
    %888 = vmatpush1.msra.mxu0 0.0
    %889 = vmatprep.subr.mxu0 0.0
    %890 = vmatpush1.msra.mxu0 0.0
    %891 = vmatprep.subr.mxu0 0.0
    %892 = vmatpush1.msra.mxu0 0.0
    %893 = vmatprep.subr.mxu0 0.0
    %894 = vmatpush1.msra.mxu0 0.0
    %895 = vmatprep.subr.mxu0 0.0
    %896 = vmatpush1.msra.mxu0 0.0
    %897 = vmatprep.mubr.f32.mxu0 0.0
    %898 = vmatmul.mubr.f32.gmra.mrb[0].mxu0 %v829
    %v899 = vpop.f32.mrb[0].mxu0
    %v900 = vadd.f32 0.0, %v899
    %v901 = vpop.f32.mrb[0].mxu0
    %v902 = vadd.f32 0.0, %v901
    %903 = vdwg.mxu0
    %904 = vmatprep.subr.mxu0 %v56
    %905 = vmatpush1.msra.mxu0 %v55
    %906 = vmatprep.subr.mxu0 %v60
    %907 = vmatpush1.msra.mxu0 %v59
    %908 = vmatprep.subr.mxu0 %v64
    %909 = vmatpush1.msra.mxu0 %v63
    %910 = vmatprep.subr.mxu0 %v68
    %911 = vmatpush1.msra.mxu0 %v67
    %912 = vmatprep.subr.mxu0 %v72
    %913 = vmatpush1.msra.mxu0 %v71
    %914 = vmatprep.subr.mxu0 %v76
    %915 = vmatpush1.msra.mxu0 %v75
    %916 = vmatprep.subr.mxu0 %v80
    %917 = vmatpush1.msra.mxu0 %v79
    %918 = vmatprep.subr.mxu0 %v84
    %919 = vmatpush1.msra.mxu0 %v83
    %920 = vmatprep.subr.mxu0 %v88
    %921 = vmatpush1.msra.mxu0 %v87
    %922 = vmatprep.subr.mxu0 %v92
    %923 = vmatpush1.msra.mxu0 %v91
    %924 = vmatprep.subr.mxu0 %v96
    %925 = vmatpush1.msra.mxu0 %v95
    %926 = vmatprep.subr.mxu0 %v100
    %927 = vmatpush1.msra.mxu0 %v99
    %928 = vmatprep.subr.mxu0 %v104
    %929 = vmatpush1.msra.mxu0 %v103
    %930 = vmatprep.subr.mxu0 %v108
    %931 = vmatpush1.msra.mxu0 %v107
    %932 = vmatprep.subr.mxu0 %v112
    %933 = vmatpush1.msra.mxu0 %v111
    %934 = vmatprep.subr.mxu0 %v116
    %935 = vmatpush1.msra.mxu0 %v115
    %936 = vmatprep.subr.mxu0 0.0
    %937 = vmatpush1.msra.mxu0 0.0
    %938 = vmatprep.subr.mxu0 0.0
    %939 = vmatpush1.msra.mxu0 0.0
    %940 = vmatprep.subr.mxu0 0.0
    %941 = vmatpush1.msra.mxu0 0.0
    %942 = vmatprep.subr.mxu0 0.0
    %943 = vmatpush1.msra.mxu0 0.0
    %944 = vmatprep.subr.mxu0 0.0
    %945 = vmatpush1.msra.mxu0 0.0
    %946 = vmatprep.subr.mxu0 0.0
    %947 = vmatpush1.msra.mxu0 0.0
    %948 = vmatprep.subr.mxu0 0.0
    %949 = vmatpush1.msra.mxu0 0.0
    %950 = vmatprep.subr.mxu0 0.0
    %951 = vmatpush1.msra.mxu0 0.0
    %952 = vmatprep.subr.mxu0 0.0
    %953 = vmatpush1.msra.mxu0 0.0
    %954 = vmatprep.subr.mxu0 0.0
    %955 = vmatpush1.msra.mxu0 0.0
    %956 = vmatprep.subr.mxu0 0.0
    %957 = vmatpush1.msra.mxu0 0.0
    %958 = vmatprep.subr.mxu0 0.0
    %959 = vmatpush1.msra.mxu0 0.0
    %960 = vmatprep.subr.mxu0 0.0
    %961 = vmatpush1.msra.mxu0 0.0
    %962 = vmatprep.subr.mxu0 0.0
    %963 = vmatpush1.msra.mxu0 0.0
    %964 = vmatprep.subr.mxu0 0.0
    %965 = vmatpush1.msra.mxu0 0.0
    %966 = vmatprep.subr.mxu0 0.0
    %967 = vmatpush1.msra.mxu0 0.0
    %968 = vmatprep.mubr.f32.mxu0 0.0
    %969 = vmatmul.mubr.f32.gmra.mrb[0].mxu0 %v829
    %v970 = vpop.f32.mrb[0].mxu0
    %v971 = vadd.f32 0.0, %v970
    %v972 = vpop.f32.mrb[0].mxu0
    %v973 = vadd.f32 0.0, %v972
    %974 = vdwg.mxu0
    %v979 = vcombine.low %v900, %v902
    %v980 = vcombine.low %v971, %v973
    %v983 = vadd.f32 %v831, %v979
    %v984 = vadd.f32 %v832, %v980
    %v985 = vmul.f32 %v983, 0.5
    %v986 = vtanh.pop %v985
    %v987 = vadd.f32 %v986, 1.0
    %v988 = vmul.f32 %v987, 0.5
    %v990 = vrot.slane %v983, 4
    %v992 = vmul.f32 %v990, 0.5
    %v993 = vtanh.pop %v992
    %v994 = vadd.f32 %v993, 1.0
    %v995 = vmul.f32 %v994, 0.5
    %v996 = vtanh.pop %v984
    %v998 = vrot.slane %v984, 4
    %v1000 = vmul.f32 %v998, 0.5
    %v1001 = vtanh.pop %v1000
    %v1002 = vadd.f32 %v1001, 1.0
    %v1003 = vmul.f32 %v1002, 0.5
    %v1004 = vmul.f32 %v995, %v827
    %v1005 = vmul.f32 %v988, %v996
    %v1006 = vadd.f32 %v1004, %v1005
    %v1007 = vtanh.pop %v1006
    %v1008 = vmul.f32 %v1003, %v1007
    %s1009 = scalar_lea.vmem [#allocation2], 80
    %v1010 = vld [vmem:[%s1009] sm:$0xff]
    %v1011 = vld [vmem:[%s1009 + $0x8] sm:$0xff]
    %1012 = vmatprep.subr.mxu0 %v54
    %1013 = vmatpush1.msra.mxu0 %v53
    %1014 = vmatprep.subr.mxu0 %v58
    %1015 = vmatpush1.msra.mxu0 %v57
    %1016 = vmatprep.subr.mxu0 %v62
    %1017 = vmatpush1.msra.mxu0 %v61
    %1018 = vmatprep.subr.mxu0 %v66
    %1019 = vmatpush1.msra.mxu0 %v65
    %1020 = vmatprep.subr.mxu0 %v70
    %1021 = vmatpush1.msra.mxu0 %v69
    %1022 = vmatprep.subr.mxu0 %v74
    %1023 = vmatpush1.msra.mxu0 %v73
    %1024 = vmatprep.subr.mxu0 %v78
    %1025 = vmatpush1.msra.mxu0 %v77
    %1026 = vmatprep.subr.mxu0 %v82
    %1027 = vmatpush1.msra.mxu0 %v81
    %1028 = vmatprep.subr.mxu0 %v86
    %1029 = vmatpush1.msra.mxu0 %v85
    %1030 = vmatprep.subr.mxu0 %v90
    %1031 = vmatpush1.msra.mxu0 %v89
    %1032 = vmatprep.subr.mxu0 %v94
    %1033 = vmatpush1.msra.mxu0 %v93
    %1034 = vmatprep.subr.mxu0 %v98
    %1035 = vmatpush1.msra.mxu0 %v97
    %1036 = vmatprep.subr.mxu0 %v102
    %1037 = vmatpush1.msra.mxu0 %v101
    %1038 = vmatprep.subr.mxu0 %v106
    %1039 = vmatpush1.msra.mxu0 %v105
    %1040 = vmatprep.subr.mxu0 %v110
    %1041 = vmatpush1.msra.mxu0 %v109
    %1042 = vmatprep.subr.mxu0 %v114
    %1043 = vmatpush1.msra.mxu0 %v113
    %1044 = vmatprep.subr.mxu0 0.0
    %1045 = vmatpush1.msra.mxu0 0.0
    %1046 = vmatprep.subr.mxu0 0.0
    %1047 = vmatpush1.msra.mxu0 0.0
    %1048 = vmatprep.subr.mxu0 0.0
    %1049 = vmatpush1.msra.mxu0 0.0
    %1050 = vmatprep.subr.mxu0 0.0
    %1051 = vmatpush1.msra.mxu0 0.0
    %1052 = vmatprep.subr.mxu0 0.0
    %1053 = vmatpush1.msra.mxu0 0.0
    %1054 = vmatprep.subr.mxu0 0.0
    %1055 = vmatpush1.msra.mxu0 0.0
    %1056 = vmatprep.subr.mxu0 0.0
    %1057 = vmatpush1.msra.mxu0 0.0
    %1058 = vmatprep.subr.mxu0 0.0
    %1059 = vmatpush1.msra.mxu0 0.0
    %1060 = vmatprep.subr.mxu0 0.0
    %1061 = vmatpush1.msra.mxu0 0.0
    %1062 = vmatprep.subr.mxu0 0.0
    %1063 = vmatpush1.msra.mxu0 0.0
    %1064 = vmatprep.subr.mxu0 0.0
    %1065 = vmatpush1.msra.mxu0 0.0
    %1066 = vmatprep.subr.mxu0 0.0
    %1067 = vmatpush1.msra.mxu0 0.0
    %1068 = vmatprep.subr.mxu0 0.0
    %1069 = vmatpush1.msra.mxu0 0.0
    %1070 = vmatprep.subr.mxu0 0.0
    %1071 = vmatpush1.msra.mxu0 0.0
    %1072 = vmatprep.subr.mxu0 0.0
    %1073 = vmatpush1.msra.mxu0 0.0
    %1074 = vmatprep.subr.mxu0 0.0
    %1075 = vmatpush1.msra.mxu0 0.0
    %1076 = vmatprep.mubr.f32.mxu0 0.0
    %1077 = vmatmul.mubr.f32.gmra.mrb[0].mxu0 %v1008
    %v1078 = vpop.f32.mrb[0].mxu0
    %v1079 = vadd.f32 0.0, %v1078
    %v1080 = vpop.f32.mrb[0].mxu0
    %v1081 = vadd.f32 0.0, %v1080
    %1082 = vdwg.mxu0
    %1083 = vmatprep.subr.mxu0 %v56
    %1084 = vmatpush1.msra.mxu0 %v55
    %1085 = vmatprep.subr.mxu0 %v60
    %1086 = vmatpush1.msra.mxu0 %v59
    %1087 = vmatprep.subr.mxu0 %v64
    %1088 = vmatpush1.msra.mxu0 %v63
    %1089 = vmatprep.subr.mxu0 %v68
    %1090 = vmatpush1.msra.mxu0 %v67
    %1091 = vmatprep.subr.mxu0 %v72
    %1092 = vmatpush1.msra.mxu0 %v71
    %1093 = vmatprep.subr.mxu0 %v76
    %1094 = vmatpush1.msra.mxu0 %v75
    %1095 = vmatprep.subr.mxu0 %v80
    %1096 = vmatpush1.msra.mxu0 %v79
    %1097 = vmatprep.subr.mxu0 %v84
    %1098 = vmatpush1.msra.mxu0 %v83
    %1099 = vmatprep.subr.mxu0 %v88
    %1100 = vmatpush1.msra.mxu0 %v87
    %1101 = vmatprep.subr.mxu0 %v92
    %1102 = vmatpush1.msra.mxu0 %v91
    %1103 = vmatprep.subr.mxu0 %v96
    %1104 = vmatpush1.msra.mxu0 %v95
    %1105 = vmatprep.subr.mxu0 %v100
    %1106 = vmatpush1.msra.mxu0 %v99
    %1107 = vmatprep.subr.mxu0 %v104
    %1108 = vmatpush1.msra.mxu0 %v103
    %1109 = vmatprep.subr.mxu0 %v108
    %1110 = vmatpush1.msra.mxu0 %v107
    %1111 = vmatprep.subr.mxu0 %v112
    %1112 = vmatpush1.msra.mxu0 %v111
    %1113 = vmatprep.subr.mxu0 %v116
    %1114 = vmatpush1.msra.mxu0 %v115
    %1115 = vmatprep.subr.mxu0 0.0
    %1116 = vmatpush1.msra.mxu0 0.0
    %1117 = vmatprep.subr.mxu0 0.0
    %1118 = vmatpush1.msra.mxu0 0.0
    %1119 = vmatprep.subr.mxu0 0.0
    %1120 = vmatpush1.msra.mxu0 0.0
    %1121 = vmatprep.subr.mxu0 0.0
    %1122 = vmatpush1.msra.mxu0 0.0
    %1123 = vmatprep.subr.mxu0 0.0
    %1124 = vmatpush1.msra.mxu0 0.0
    %1125 = vmatprep.subr.mxu0 0.0
    %1126 = vmatpush1.msra.mxu0 0.0
    %1127 = vmatprep.subr.mxu0 0.0
    %1128 = vmatpush1.msra.mxu0 0.0
    %1129 = vmatprep.subr.mxu0 0.0
    %1130 = vmatpush1.msra.mxu0 0.0
    %1131 = vmatprep.subr.mxu0 0.0
    %1132 = vmatpush1.msra.mxu0 0.0
    %1133 = vmatprep.subr.mxu0 0.0
    %1134 = vmatpush1.msra.mxu0 0.0
    %1135 = vmatprep.subr.mxu0 0.0
    %1136 = vmatpush1.msra.mxu0 0.0
    %1137 = vmatprep.subr.mxu0 0.0
    %1138 = vmatpush1.msra.mxu0 0.0
    %1139 = vmatprep.subr.mxu0 0.0
    %1140 = vmatpush1.msra.mxu0 0.0
    %1141 = vmatprep.subr.mxu0 0.0
    %1142 = vmatpush1.msra.mxu0 0.0
    %1143 = vmatprep.subr.mxu0 0.0
    %1144 = vmatpush1.msra.mxu0 0.0
    %1145 = vmatprep.subr.mxu0 0.0
    %1146 = vmatpush1.msra.mxu0 0.0
    %1147 = vmatprep.mubr.f32.mxu0 0.0
    %1148 = vmatmul.mubr.f32.gmra.mrb[0].mxu0 %v1008
    %v1149 = vpop.f32.mrb[0].mxu0
    %v1150 = vadd.f32 0.0, %v1149
    %v1151 = vpop.f32.mrb[0].mxu0
    %v1152 = vadd.f32 0.0, %v1151
    %1153 = vdwg.mxu0
    %v1158 = vcombine.low %v1079, %v1081
    %v1159 = vcombine.low %v1150, %v1152
    %v1162 = vadd.f32 %v1010, %v1158
    %v1163 = vadd.f32 %v1011, %v1159
    %v1164 = vmul.f32 %v1162, 0.5
    %v1165 = vtanh.pop %v1164
    %v1166 = vadd.f32 %v1165, 1.0
    %v1167 = vmul.f32 %v1166, 0.5
    %v1169 = vrot.slane %v1162, 4
    %v1171 = vmul.f32 %v1169, 0.5
    %v1172 = vtanh.pop %v1171
    %v1173 = vadd.f32 %v1172, 1.0
    %v1174 = vmul.f32 %v1173, 0.5
    %v1175 = vtanh.pop %v1163
    %v1177 = vrot.slane %v1163, 4
    %v1179 = vmul.f32 %v1177, 0.5
    %v1180 = vtanh.pop %v1179
    %v1181 = vadd.f32 %v1180, 1.0
    %v1182 = vmul.f32 %v1181, 0.5
    %v1183 = vmul.f32 %v1174, %v1006
    %v1184 = vmul.f32 %v1167, %v1175
    %v1185 = vadd.f32 %v1183, %v1184
    %v1186 = vtanh.pop %v1185
    %v1187 = vmul.f32 %v1182, %v1186
    %s1188 = scalar_lea.vmem [#allocation2], 96
    %v1189 = vld [vmem:[%s1188] sm:$0xff]
    %v1190 = vld [vmem:[%s1188 + $0x8] sm:$0xff]
    %1191 = vmatprep.subr.mxu0 %v54
    %1192 = vmatpush1.msra.mxu0 %v53
    %1193 = vmatprep.subr.mxu0 %v58
    %1194 = vmatpush1.msra.mxu0 %v57
    %1195 = vmatprep.subr.mxu0 %v62
    %1196 = vmatpush1.msra.mxu0 %v61
    %1197 = vmatprep.subr.mxu0 %v66
    %1198 = vmatpush1.msra.mxu0 %v65
    %1199 = vmatprep.subr.mxu0 %v70
    %1200 = vmatpush1.msra.mxu0 %v69
    %1201 = vmatprep.subr.mxu0 %v74
    %1202 = vmatpush1.msra.mxu0 %v73
    %1203 = vmatprep.subr.mxu0 %v78
    %1204 = vmatpush1.msra.mxu0 %v77
    %1205 = vmatprep.subr.mxu0 %v82
    %1206 = vmatpush1.msra.mxu0 %v81
    %1207 = vmatprep.subr.mxu0 %v86
    %1208 = vmatpush1.msra.mxu0 %v85
    %1209 = vmatprep.subr.mxu0 %v90
    %1210 = vmatpush1.msra.mxu0 %v89
    %1211 = vmatprep.subr.mxu0 %v94
    %1212 = vmatpush1.msra.mxu0 %v93
    %1213 = vmatprep.subr.mxu0 %v98
    %1214 = vmatpush1.msra.mxu0 %v97
    %1215 = vmatprep.subr.mxu0 %v102
    %1216 = vmatpush1.msra.mxu0 %v101
    %1217 = vmatprep.subr.mxu0 %v106
    %1218 = vmatpush1.msra.mxu0 %v105
    %1219 = vmatprep.subr.mxu0 %v110
    %1220 = vmatpush1.msra.mxu0 %v109
    %1221 = vmatprep.subr.mxu0 %v114
    %1222 = vmatpush1.msra.mxu0 %v113
    %1223 = vmatprep.subr.mxu0 0.0
    %1224 = vmatpush1.msra.mxu0 0.0
    %1225 = vmatprep.subr.mxu0 0.0
    %1226 = vmatpush1.msra.mxu0 0.0
    %1227 = vmatprep.subr.mxu0 0.0
    %1228 = vmatpush1.msra.mxu0 0.0
    %1229 = vmatprep.subr.mxu0 0.0
    %1230 = vmatpush1.msra.mxu0 0.0
    %1231 = vmatprep.subr.mxu0 0.0
    %1232 = vmatpush1.msra.mxu0 0.0
    %1233 = vmatprep.subr.mxu0 0.0
    %1234 = vmatpush1.msra.mxu0 0.0
    %1235 = vmatprep.subr.mxu0 0.0
    %1236 = vmatpush1.msra.mxu0 0.0
    %1237 = vmatprep.subr.mxu0 0.0
    %1238 = vmatpush1.msra.mxu0 0.0
    %1239 = vmatprep.subr.mxu0 0.0
    %1240 = vmatpush1.msra.mxu0 0.0
    %1241 = vmatprep.subr.mxu0 0.0
    %1242 = vmatpush1.msra.mxu0 0.0
    %1243 = vmatprep.subr.mxu0 0.0
    %1244 = vmatpush1.msra.mxu0 0.0
    %1245 = vmatprep.subr.mxu0 0.0
    %1246 = vmatpush1.msra.mxu0 0.0
    %1247 = vmatprep.subr.mxu0 0.0
    %1248 = vmatpush1.msra.mxu0 0.0
    %1249 = vmatprep.subr.mxu0 0.0
    %1250 = vmatpush1.msra.mxu0 0.0
    %1251 = vmatprep.subr.mxu0 0.0
    %1252 = vmatpush1.msra.mxu0 0.0
    %1253 = vmatprep.subr.mxu0 0.0
    %1254 = vmatpush1.msra.mxu0 0.0
    %1255 = vmatprep.mubr.f32.mxu0 0.0
    %1256 = vmatmul.mubr.f32.gmra.mrb[0].mxu0 %v1187
    %v1257 = vpop.f32.mrb[0].mxu0
    %v1258 = vadd.f32 0.0, %v1257
    %v1259 = vpop.f32.mrb[0].mxu0
    %v1260 = vadd.f32 0.0, %v1259
    %1261 = vdwg.mxu0
    %1262 = vmatprep.subr.mxu0 %v56
    %1263 = vmatpush1.msra.mxu0 %v55
    %1264 = vmatprep.subr.mxu0 %v60
    %1265 = vmatpush1.msra.mxu0 %v59
    %1266 = vmatprep.subr.mxu0 %v64
    %1267 = vmatpush1.msra.mxu0 %v63
    %1268 = vmatprep.subr.mxu0 %v68
    %1269 = vmatpush1.msra.mxu0 %v67
    %1270 = vmatprep.subr.mxu0 %v72
    %1271 = vmatpush1.msra.mxu0 %v71
    %1272 = vmatprep.subr.mxu0 %v76
    %1273 = vmatpush1.msra.mxu0 %v75
    %1274 = vmatprep.subr.mxu0 %v80
    %1275 = vmatpush1.msra.mxu0 %v79
    %1276 = vmatprep.subr.mxu0 %v84
    %1277 = vmatpush1.msra.mxu0 %v83
    %1278 = vmatprep.subr.mxu0 %v88
    %1279 = vmatpush1.msra.mxu0 %v87
    %1280 = vmatprep.subr.mxu0 %v92
    %1281 = vmatpush1.msra.mxu0 %v91
    %1282 = vmatprep.subr.mxu0 %v96
    %1283 = vmatpush1.msra.mxu0 %v95
    %1284 = vmatprep.subr.mxu0 %v100
    %1285 = vmatpush1.msra.mxu0 %v99
    %1286 = vmatprep.subr.mxu0 %v104
    %1287 = vmatpush1.msra.mxu0 %v103
    %1288 = vmatprep.subr.mxu0 %v108
    %1289 = vmatpush1.msra.mxu0 %v107
    %1290 = vmatprep.subr.mxu0 %v112
    %1291 = vmatpush1.msra.mxu0 %v111
    %1292 = vmatprep.subr.mxu0 %v116
    %1293 = vmatpush1.msra.mxu0 %v115
    %1294 = vmatprep.subr.mxu0 0.0
    %1295 = vmatpush1.msra.mxu0 0.0
    %1296 = vmatprep.subr.mxu0 0.0
    %1297 = vmatpush1.msra.mxu0 0.0
    %1298 = vmatprep.subr.mxu0 0.0
    %1299 = vmatpush1.msra.mxu0 0.0
    %1300 = vmatprep.subr.mxu0 0.0
    %1301 = vmatpush1.msra.mxu0 0.0
    %1302 = vmatprep.subr.mxu0 0.0
    %1303 = vmatpush1.msra.mxu0 0.0
    %1304 = vmatprep.subr.mxu0 0.0
    %1305 = vmatpush1.msra.mxu0 0.0
    %1306 = vmatprep.subr.mxu0 0.0
    %1307 = vmatpush1.msra.mxu0 0.0
    %1308 = vmatprep.subr.mxu0 0.0
    %1309 = vmatpush1.msra.mxu0 0.0
    %1310 = vmatprep.subr.mxu0 0.0
    %1311 = vmatpush1.msra.mxu0 0.0
    %1312 = vmatprep.subr.mxu0 0.0
    %1313 = vmatpush1.msra.mxu0 0.0
    %1314 = vmatprep.subr.mxu0 0.0
    %1315 = vmatpush1.msra.mxu0 0.0
    %1316 = vmatprep.subr.mxu0 0.0
    %1317 = vmatpush1.msra.mxu0 0.0
    %1318 = vmatprep.subr.mxu0 0.0
    %1319 = vmatpush1.msra.mxu0 0.0
    %1320 = vmatprep.subr.mxu0 0.0
    %1321 = vmatpush1.msra.mxu0 0.0
    %1322 = vmatprep.subr.mxu0 0.0
    %1323 = vmatpush1.msra.mxu0 0.0
    %1324 = vmatprep.subr.mxu0 0.0
    %1325 = vmatpush1.msra.mxu0 0.0
    %1326 = vmatprep.mubr.f32.mxu0 0.0
    %1327 = vmatmul.mubr.f32.gmra.mrb[0].mxu0 %v1187
    %v1328 = vpop.f32.mrb[0].mxu0
    %v1329 = vadd.f32 0.0, %v1328
    %v1330 = vpop.f32.mrb[0].mxu0
    %v1331 = vadd.f32 0.0, %v1330
    %1332 = vdwg.mxu0
    %v1337 = vcombine.low %v1258, %v1260
    %v1338 = vcombine.low %v1329, %v1331
    %v1341 = vadd.f32 %v1189, %v1337
    %v1342 = vadd.f32 %v1190, %v1338
    %v1343 = vmul.f32 %v1341, 0.5
    %v1344 = vtanh.pop %v1343
    %v1345 = vadd.f32 %v1344, 1.0
    %v1346 = vmul.f32 %v1345, 0.5
    %v1348 = vrot.slane %v1341, 4
    %v1350 = vmul.f32 %v1348, 0.5
    %v1351 = vtanh.pop %v1350
    %v1352 = vadd.f32 %v1351, 1.0
    %v1353 = vmul.f32 %v1352, 0.5
    %v1354 = vtanh.pop %v1342
    %v1356 = vrot.slane %v1342, 4
    %v1358 = vmul.f32 %v1356, 0.5
    %v1359 = vtanh.pop %v1358
    %v1360 = vadd.f32 %v1359, 1.0
    %v1361 = vmul.f32 %v1360, 0.5
    %v1362 = vmul.f32 %v1353, %v1185
    %v1363 = vmul.f32 %v1346, %v1354
    %v1364 = vadd.f32 %v1362, %v1363
    %v1365 = vtanh.pop %v1364
    %v1366 = vmul.f32 %v1361, %v1365
    %s1367 = scalar_lea.vmem [#allocation2], 112
    %v1368 = vld [vmem:[%s1367] sm:$0xff]
    %v1369 = vld [vmem:[%s1367 + $0x8] sm:$0xff]
    %1370 = vmatprep.subr.mxu0 %v54
    %1371 = vmatpush1.msra.mxu0 %v53
    %1372 = vmatprep.subr.mxu0 %v58
    %1373 = vmatpush1.msra.mxu0 %v57
    %1374 = vmatprep.subr.mxu0 %v62
    %1375 = vmatpush1.msra.mxu0 %v61
    %1376 = vmatprep.subr.mxu0 %v66
    %1377 = vmatpush1.msra.mxu0 %v65
    %1378 = vmatprep.subr.mxu0 %v70
    %1379 = vmatpush1.msra.mxu0 %v69
    %1380 = vmatprep.subr.mxu0 %v74
    %1381 = vmatpush1.msra.mxu0 %v73
    %1382 = vmatprep.subr.mxu0 %v78
    %1383 = vmatpush1.msra.mxu0 %v77
    %1384 = vmatprep.subr.mxu0 %v82
    %1385 = vmatpush1.msra.mxu0 %v81
    %1386 = vmatprep.subr.mxu0 %v86
    %1387 = vmatpush1.msra.mxu0 %v85
    %1388 = vmatprep.subr.mxu0 %v90
    %1389 = vmatpush1.msra.mxu0 %v89
    %1390 = vmatprep.subr.mxu0 %v94
    %1391 = vmatpush1.msra.mxu0 %v93
    %1392 = vmatprep.subr.mxu0 %v98
    %1393 = vmatpush1.msra.mxu0 %v97
    %1394 = vmatprep.subr.mxu0 %v102
    %1395 = vmatpush1.msra.mxu0 %v101
    %1396 = vmatprep.subr.mxu0 %v106
    %1397 = vmatpush1.msra.mxu0 %v105
    %1398 = vmatprep.subr.mxu0 %v110
    %1399 = vmatpush1.msra.mxu0 %v109
    %1400 = vmatprep.subr.mxu0 %v114
    %1401 = vmatpush1.msra.mxu0 %v113
    %1402 = vmatprep.subr.mxu0 0.0
    %1403 = vmatpush1.msra.mxu0 0.0
    %1404 = vmatprep.subr.mxu0 0.0
    %1405 = vmatpush1.msra.mxu0 0.0
    %1406 = vmatprep.subr.mxu0 0.0
    %1407 = vmatpush1.msra.mxu0 0.0
    %1408 = vmatprep.subr.mxu0 0.0
    %1409 = vmatpush1.msra.mxu0 0.0
    %1410 = vmatprep.subr.mxu0 0.0
    %1411 = vmatpush1.msra.mxu0 0.0
    %1412 = vmatprep.subr.mxu0 0.0
    %1413 = vmatpush1.msra.mxu0 0.0
    %1414 = vmatprep.subr.mxu0 0.0
    %1415 = vmatpush1.msra.mxu0 0.0
    %1416 = vmatprep.subr.mxu0 0.0
    %1417 = vmatpush1.msra.mxu0 0.0
    %1418 = vmatprep.subr.mxu0 0.0
    %1419 = vmatpush1.msra.mxu0 0.0
    %1420 = vmatprep.subr.mxu0 0.0
    %1421 = vmatpush1.msra.mxu0 0.0
    %1422 = vmatprep.subr.mxu0 0.0
    %1423 = vmatpush1.msra.mxu0 0.0
    %1424 = vmatprep.subr.mxu0 0.0
    %1425 = vmatpush1.msra.mxu0 0.0
    %1426 = vmatprep.subr.mxu0 0.0
    %1427 = vmatpush1.msra.mxu0 0.0
    %1428 = vmatprep.subr.mxu0 0.0
    %1429 = vmatpush1.msra.mxu0 0.0
    %1430 = vmatprep.subr.mxu0 0.0
    %1431 = vmatpush1.msra.mxu0 0.0
    %1432 = vmatprep.subr.mxu0 0.0
    %1433 = vmatpush1.msra.mxu0 0.0
    %1434 = vmatprep.mubr.f32.mxu0 0.0
    %1435 = vmatmul.mubr.f32.gmra.mrb[0].mxu0 %v1366
    %v1436 = vpop.f32.mrb[0].mxu0
    %v1437 = vadd.f32 0.0, %v1436
    %v1438 = vpop.f32.mrb[0].mxu0
    %v1439 = vadd.f32 0.0, %v1438
    %1440 = vdwg.mxu0
    %1441 = vmatprep.subr.mxu0 %v56
    %1442 = vmatpush1.msra.mxu0 %v55
    %1443 = vmatprep.subr.mxu0 %v60
    %1444 = vmatpush1.msra.mxu0 %v59
    %1445 = vmatprep.subr.mxu0 %v64
    %1446 = vmatpush1.msra.mxu0 %v63
    %1447 = vmatprep.subr.mxu0 %v68
    %1448 = vmatpush1.msra.mxu0 %v67
    %1449 = vmatprep.subr.mxu0 %v72
    %1450 = vmatpush1.msra.mxu0 %v71
    %1451 = vmatprep.subr.mxu0 %v76
    %1452 = vmatpush1.msra.mxu0 %v75
    %1453 = vmatprep.subr.mxu0 %v80
    %1454 = vmatpush1.msra.mxu0 %v79
    %1455 = vmatprep.subr.mxu0 %v84
    %1456 = vmatpush1.msra.mxu0 %v83
    %1457 = vmatprep.subr.mxu0 %v88
    %1458 = vmatpush1.msra.mxu0 %v87
    %1459 = vmatprep.subr.mxu0 %v92
    %1460 = vmatpush1.msra.mxu0 %v91
    %1461 = vmatprep.subr.mxu0 %v96
    %1462 = vmatpush1.msra.mxu0 %v95
    %1463 = vmatprep.subr.mxu0 %v100
    %1464 = vmatpush1.msra.mxu0 %v99
    %1465 = vmatprep.subr.mxu0 %v104
    %1466 = vmatpush1.msra.mxu0 %v103
    %1467 = vmatprep.subr.mxu0 %v108
    %1468 = vmatpush1.msra.mxu0 %v107
    %1469 = vmatprep.subr.mxu0 %v112
    %1470 = vmatpush1.msra.mxu0 %v111
    %1471 = vmatprep.subr.mxu0 %v116
    %1472 = vmatpush1.msra.mxu0 %v115
    %1473 = vmatprep.subr.mxu0 0.0
    %1474 = vmatpush1.msra.mxu0 0.0
    %1475 = vmatprep.subr.mxu0 0.0
    %1476 = vmatpush1.msra.mxu0 0.0
    %1477 = vmatprep.subr.mxu0 0.0
    %1478 = vmatpush1.msra.mxu0 0.0
    %1479 = vmatprep.subr.mxu0 0.0
    %1480 = vmatpush1.msra.mxu0 0.0
    %1481 = vmatprep.subr.mxu0 0.0
    %1482 = vmatpush1.msra.mxu0 0.0
    %1483 = vmatprep.subr.mxu0 0.0
    %1484 = vmatpush1.msra.mxu0 0.0
    %1485 = vmatprep.subr.mxu0 0.0
    %1486 = vmatpush1.msra.mxu0 0.0
    %1487 = vmatprep.subr.mxu0 0.0
    %1488 = vmatpush1.msra.mxu0 0.0
    %1489 = vmatprep.subr.mxu0 0.0
    %1490 = vmatpush1.msra.mxu0 0.0
    %1491 = vmatprep.subr.mxu0 0.0
    %1492 = vmatpush1.msra.mxu0 0.0
    %1493 = vmatprep.subr.mxu0 0.0
    %1494 = vmatpush1.msra.mxu0 0.0
    %1495 = vmatprep.subr.mxu0 0.0
    %1496 = vmatpush1.msra.mxu0 0.0
    %1497 = vmatprep.subr.mxu0 0.0
    %1498 = vmatpush1.msra.mxu0 0.0
    %1499 = vmatprep.subr.mxu0 0.0
    %1500 = vmatpush1.msra.mxu0 0.0
    %1501 = vmatprep.subr.mxu0 0.0
    %1502 = vmatpush1.msra.mxu0 0.0
    %1503 = vmatprep.subr.mxu0 0.0
    %1504 = vmatpush1.msra.mxu0 0.0
    %1505 = vmatprep.mubr.f32.mxu0 0.0
    %1506 = vmatmul.mubr.f32.gmra.mrb[0].mxu0 %v1366
    %v1507 = vpop.f32.mrb[0].mxu0
    %v1508 = vadd.f32 0.0, %v1507
    %v1509 = vpop.f32.mrb[0].mxu0
    %v1510 = vadd.f32 0.0, %v1509
    %1511 = vdwg.mxu0
    %v1516 = vcombine.low %v1437, %v1439
    %v1517 = vcombine.low %v1508, %v1510
    %v1520 = vadd.f32 %v1368, %v1516
    %v1521 = vadd.f32 %v1369, %v1517
    %v1522 = vmul.f32 %v1520, 0.5
    %v1523 = vtanh.pop %v1522
    %v1524 = vadd.f32 %v1523, 1.0
    %v1525 = vmul.f32 %v1524, 0.5
    %v1527 = vrot.slane %v1520, 4
    %v1529 = vmul.f32 %v1527, 0.5
    %v1530 = vtanh.pop %v1529
    %v1531 = vadd.f32 %v1530, 1.0
    %v1532 = vmul.f32 %v1531, 0.5
    %v1533 = vtanh.pop %v1521
    %v1535 = vrot.slane %v1521, 4
    %v1537 = vmul.f32 %v1535, 0.5
    %v1538 = vtanh.pop %v1537
    %v1539 = vadd.f32 %v1538, 1.0
    %v1540 = vmul.f32 %v1539, 0.5
    %v1541 = vmul.f32 %v1532, %v1364
    %v1542 = vmul.f32 %v1525, %v1533
    %v1543 = vadd.f32 %v1541, %v1542
    %v1544 = vtanh.pop %v1543
    %v1545 = vmul.f32 %v1540, %v1544
    %1546 = vst [vmem:[#allocation7] sm:$0xf] %v1545
    %1547 = vst [vmem:[#allocation8] sm:$0xf] %v1543
    // Predicated region
    $region22: #{tpu_custom_call.1} parent=1 // pred_check
      _
    $region23: #{tpu_custom_call.1} parent=1 // pred_check_branch
      %1549 = sbr.rel (0) target = $region25
    $region24: #{tpu_custom_call.1} parent=1 // pred_region
      %s1551 = ssub.s32 64, 64
      %1552 = vsyncadd [#allocation4], %s1551
      %s1554 = sshll.u32 [#allocation7], 4
      %s1555 = int_to_ptr.vmem [resolvable:$true] %s1554
      %1557 = dma.vmem_to_hbm [thread:$0]  %s1555, 64, %s2, [#allocation4]
    $region25: #{tpu_custom_call.1} parent=1 // pred_fallthru
      _
    // Predicated region
    $region26: #{tpu_custom_call.1} parent=1 // pred_check
      _
    $region27: #{tpu_custom_call.1} parent=1 // pred_check_branch
      %1559 = sbr.rel (0) target = $region29
    $region28: #{tpu_custom_call.1} parent=1 // pred_region
      %s1561 = ssub.s32 64, 64
      %1562 = vsyncadd [#allocation9], %s1561
      %s1564 = sshll.u32 [#allocation8], 4
      %s1565 = int_to_ptr.vmem [resolvable:$true] %s1564
      %1567 = dma.vmem_to_hbm [thread:$0]  %s1565, 64, %s3, [#allocation9]
    $region29: #{tpu_custom_call.1} parent=1 // pred_fallthru
      _
    // Predicated region
    $region30: #{tpu_custom_call.1} parent=1 // pred_check
      _
    $region31: #{tpu_custom_call.1} parent=1 // pred_check_branch
      %1569 = sbr.rel (0) target = $region33
    $region32: #{tpu_custom_call.1} parent=1 // pred_region
      %1570 = dma.done [#allocation4], 64
    $region33: #{tpu_custom_call.1} parent=1 // pred_fallthru
      _
    // Predicated region
    $region34: #{tpu_custom_call.1} parent=1 // pred_check
      _
    $region35: #{tpu_custom_call.1} parent=1 // pred_check_branch
      %1572 = sbr.rel (0) target = $region37
    $region36: #{tpu_custom_call.1} parent=1 // pred_region
      %1573 = dma.done [#allocation9], 64
    $region37: #{tpu_custom_call.1} parent=1 // pred_fallthru
      _
    %1574 = vsyncpa [#allocation3], 1
    %1575 = vsyncpa [#allocation6], 1
    %1576 = vsyncpa [#allocation4], 1
    %1577 = vsyncpa [#allocation9], 1

</llo_original>
